<compile_context>
chip_gen: v6e
topology: v6e:2x2x1
jax: 0.10.0
libtpu: 0.0.40
codegen_flags: <defaults>
</compile_context>

<pallas_src>
import functools
import math

import jax
import jax.numpy as jnp
from jax.experimental import pallas as pl
from jax.experimental.pallas import tpu as pltpu


def _round_up(x, m):
    return (x + m - 1) // m * m


# ---------------------------------------------------------------------------
# Kernel
# ---------------------------------------------------------------------------
def mapping_kernel(*refs, c_dim, embed_features, num_layers, eps, alpha, compute_dtype):
    if c_dim > 0:
        (z_ref, c_ref, we_ref, be_ref, w0z_ref, w0y_ref, b0_ref,
         ws_ref, bs_ref, o_ref) = refs
    else:
        (z_ref, w0z_ref, b0_ref, ws_ref, bs_ref, o_ref) = refs

    # normalize_2nd_moment(z): z features are unpadded, so a plain mean is exact.
    # TODO(synk): z_dim == 0 (conditioning-only mapping) path is not implemented.
    z = z_ref[...].astype(jnp.float32)
    x = z * jax.lax.rsqrt(jnp.mean(z * z, axis=1, keepdims=True) + eps)

    # fc0, concat-free: x @ W0z + y @ W0y.  All scalar gains are pre-folded into the
    # (bf16) weights and (f32) biases, so the body is dot + bias + leaky-relu only.
    h = jnp.dot(x.astype(compute_dtype), w0z_ref[...],
                preferred_element_type=jnp.float32)

    if c_dim > 0:
        c = c_ref[...].astype(compute_dtype)
        y = jnp.dot(c, we_ref[...], preferred_element_type=jnp.float32) + be_ref[...]
        # Embed feature axis may be zero-padded to a lane multiple; padded columns are
        # exactly zero, so sum / true_feature_count reproduces the unpadded mean.
        y = y * jax.lax.rsqrt(
            jnp.sum(y * y, axis=1, keepdims=True) * (1.0 / embed_features) + eps)
        h = h + jnp.dot(y.astype(compute_dtype), w0y_ref[...],
                        preferred_element_type=jnp.float32)

    h = h + b0_ref[...]
    x = jnp.maximum(h, alpha * h)          # lrelu; sqrt(2) gain folded into weights/biases

    # fc1 .. fc{num_layers-1}: one weight slice live at a time (static ref index).
    for idx in range(num_layers - 1):
        h = jnp.dot(x.astype(compute_dtype), ws_ref[idx],
                    preferred_element_type=jnp.float32) + bs_ref[idx]
        x = jnp.maximum(h, alpha * h)

    o_ref[...] = x.astype(o_ref.dtype)


# ---------------------------------------------------------------------------
# One-time parameter preparation (cache the result across forward calls)
# ---------------------------------------------------------------------------
def prepare_params(params, *, z_dim, c_dim, w_dim, num_layers=8,
                   lr_multiplier=0.01, compute_dtype=jnp.bfloat16):
    """Transpose weights to (in, out), fold every scalar gain (weight_gain,
    bias_gain=lr_multiplier, lrelu gain sqrt(2), embed 1/sqrt(c_dim)) into the tensors,
    zero-pad feature axes to a 128-lane multiple and cast matmul operands to
    `compute_dtype`.  Do this ONCE and reuse the result for every forward call."""
    embed_features = w_dim if c_dim > 0 else 0
    layer_features = w_dim
    act_gain = math.sqrt(2.0)

    f_pad = _round_up(layer_features, 128)
    e_pad = _round_up(embed_features, 128) if c_dim > 0 else 0

    def pad_to(a, shape):
        pads = [(0, t - s) for s, t in zip(a.shape, shape)]
        return a if all(p == (0, 0) for p in pads) else jnp.pad(a, pads)

    g0 = lr_multiplier / math.sqrt(z_dim + embed_features)
    gl = lr_multiplier / math.sqrt(layer_features)

    w0 = params["fc0_w"].astype(jnp.float32)                     # (F, z_dim + E)
    out = {
        "w0z": pad_to(jnp.transpose(w0[:, :z_dim]) * (g0 * act_gain),
                      (z_dim, f_pad)).astype(compute_dtype),
        "b0": pad_to(params["fc0_b"].astype(jnp.float32) * (lr_multiplier * act_gain),
                     (1, f_pad)),
        "ws": pad_to(jnp.transpose(params["fcs_w"].astype(jnp.float32), (0, 2, 1))
                     * (gl * act_gain),
                     (num_layers - 1, f_pad, f_pad)).astype(compute_dtype),
        "bs": pad_to(params["fcs_b"].astype(jnp.float32)[:, None, :]
                     * (lr_multiplier * act_gain),
                     (num_layers - 1, 1, f_pad)),
    }
    if c_dim > 0:
        out["we"] = pad_to(jnp.transpose(params["embed_w"].astype(jnp.float32))
                           * (1.0 / math.sqrt(c_dim)),
                           (c_dim, e_pad)).astype(compute_dtype)
        out["be"] = pad_to(params["embed_b"].astype(jnp.float32), (1, e_pad))
        out["w0y"] = pad_to(jnp.transpose(w0[:, z_dim:]) * (g0 * act_gain),
                            (e_pad, f_pad)).astype(compute_dtype)

    meta = dict(z_dim=z_dim, c_dim=c_dim, w_dim=w_dim, num_layers=num_layers,
                embed_features=embed_features, f_pad=f_pad, e_pad=e_pad,
                compute_dtype=compute_dtype)
    return out, meta


# ---------------------------------------------------------------------------
# Forward wrapper
# ---------------------------------------------------------------------------
def mapping_network_forward(z, c, prepped, meta, *, num_ws, batch_tile=512):
    z_dim, c_dim, w_dim = meta["z_dim"], meta["c_dim"], meta["w_dim"]
    num_layers, embed_features = meta["num_layers"], meta["embed_features"]
    f_pad, e_pad = meta["f_pad"], meta["e_pad"]
    compute_dtype = meta["compute_dtype"]
    batch = z.shape[0]

    # Batch tiling: at least 2 tiles when the batch allows (keeps both v7x TensorCores
    # busy via the "parallel" grid axis); capped at batch_tile (512 amortizes per-step
    # overhead on v5e/v6e's 128 MiB VMEM).  Tile rows are a multiple of 8 sublanes.
    half = _round_up(max(1, (batch + 1) // 2), 8)
    tb = max(8, min(batch_tile, half))
    padded = _round_up(batch, tb)
    num_tiles = padded // tb

    zp = z if padded == batch else jnp.pad(z, ((0, padded - batch), (0, 0)))
    row = lambda i: (i, 0)

    def const_spec(shape, single_buffer):
        idx = lambda i: (0,) * len(shape)
        if single_buffer and hasattr(pl, "Buffered"):
            # Constant blocks never change across grid steps -> single buffer halves
            # their VMEM residency.
            return pl.BlockSpec(shape, idx, pipeline_mode=pl.Buffered(1))
        return pl.BlockSpec(shape, idx)

    def build_inputs_and_specs(single_buffer):
        if c_dim > 0:
            cp = c if padded == batch else jnp.pad(c, ((0, padded - batch), (0, 0)))
            inputs = (zp, cp, prepped["we"], prepped["be"], prepped["w0z"],
                      prepped["w0y"], prepped["b0"], prepped["ws"], prepped["bs"])
            in_specs = [
                pl.BlockSpec((tb, z_dim), row),
                pl.BlockSpec((tb, c_dim), row),
                const_spec((c_dim, e_pad), single_buffer),
                const_spec((1, e_pad), single_buffer),
                const_spec((z_dim, f_pad), single_buffer),
                const_spec((e_pad, f_pad), single_buffer),
                const_spec((1, f_pad), single_buffer),
                const_spec((num_layers - 1, f_pad, f_pad), single_buffer),
                const_spec((num_layers - 1, 1, f_pad), single_buffer),
            ]
        else:
            inputs = (zp, prepped["w0z"], prepped["b0"], prepped["ws"], prepped["bs"])
            in_specs = [
                pl.BlockSpec((tb, z_dim), row),
                const_spec((z_dim, f_pad), single_buffer),
                const_spec((1, f_pad), single_buffer),
                const_spec((num_layers - 1, f_pad, f_pad), single_buffer),
                const_spec((num_layers - 1, 1, f_pad), single_buffer),
            ]
        return inputs, in_specs

    kernel = functools.partial(
        mapping_kernel, c_dim=c_dim, embed_features=embed_features,
        num_layers=num_layers, eps=1e-8, alpha=0.2, compute_dtype=compute_dtype)

    # VMEM budget: weights (counted double-buffered for safety) + double-buffered I/O
    # tiles + generous headroom for compiler-materialized (tb, f_pad) f32 temporaries,
    # capped at ~75% of the physical per-core VMEM (leaves Mosaic scratch headroom on v7x).
    try:
        vmem_cap = int(pltpu.get_tpu_info().vmem_capacity_bytes)
    except Exception:
        vmem_cap = 128 * 2 ** 20
    wbytes = jnp.dtype(compute_dtype).itemsize
    weight_bytes = (wbytes * (c_dim * e_pad + z_dim * f_pad + e_pad * f_pad
                              + (num_layers - 1) * f_pad * f_pad)
                    + 4 * (e_pad + f_pad + (num_layers - 1) * f_pad))
    act_bytes = 4 * tb * (2 * (z_dim + c_dim + f_pad) + 8 * f_pad)
    vmem_limit = int(min(int(0.75 * vmem_cap),
                         max(32 * 2 ** 20, 2 * weight_bytes + act_bytes + (4 << 20))))

    def run(single_buffer):
        inputs, in_specs = build_inputs_and_specs(single_buffer)
        call = pl.pallas_call(
            kernel,
            out_shape=jax.ShapeDtypeStruct((padded, f_pad), jnp.float32),
            grid=(num_tiles,),
            in_specs=in_specs,
            out_specs=pl.BlockSpec((tb, f_pad), row),
            compiler_params=pltpu.CompilerParams(
                dimension_semantics=("parallel",),
                vmem_limit_bytes=vmem_limit),
        )
        return call(*inputs)

    if hasattr(pl, "Buffered"):
        try:
            out2d = run(True)
        except Exception:          # pipeline_mode unsupported in this runtime -> fallback
            out2d = run(False)
    else:
        out2d = run(False)

    w = out2d[:batch, :w_dim]
    if num_ws is None:
        return w
    # num_ws repeat is a free XLA broadcast; doing it in-kernel would multiply HBM writeback.
    return jnp.broadcast_to(w[:, None, :], (batch, num_ws, w_dim))


# ---------------------------------------------------------------------------
# Init + pure-JAX reference (mirrors the PyTorch forward)
# ---------------------------------------------------------------------------
def init_params(key, *, z_dim, c_dim, w_dim, num_layers=8, lr_multiplier=0.01):
    """Deterministic init matching the PyTorch __init__ (randn(out,in)/lr_mult, bias=0)."""
    embed_features = w_dim if c_dim > 0 else 0
    layer_features = w_dim
    keys = jax.random.split(key, num_layers + 1)
    p = {}
    if c_dim > 0:
        p["embed_w"] = jax.random.normal(keys[0], (embed_features, c_dim), jnp.float32)
        p["embed_b"] = jnp.zeros((1, embed_features), jnp.float32)
    in0 = z_dim + embed_features
    p["fc0_w"] = jax.random.normal(keys[1], (layer_features, in0), jnp.float32) / lr_multiplier
    p["fc0_b"] = jnp.zeros((1, layer_features), jnp.float32)
    ws = [jax.random.normal(keys[2 + i], (layer_features, layer_features), jnp.float32)
          / lr_multiplier for i in range(num_layers - 1)]
    p["fcs_w"] = jnp.stack(ws, axis=0)
    p["fcs_b"] = jnp.zeros((num_layers - 1, layer_features), jnp.float32)
    return p


def reference_forward(z, c, params, *, z_dim, c_dim, w_dim, num_ws,
                      num_layers=8, lr_multiplier=0.01):
    eps = 1e-8
    alpha, gain = 0.2, math.sqrt(2.0)
    embed_features = w_dim if c_dim > 0 else 0
    layer_features = w_dim

    def norm2(v):
        return v * jax.lax.rsqrt(jnp.mean(v * v, axis=1, keepdims=True) + eps)

    x = norm2(z.astype(jnp.float32))
    if c_dim > 0:
        we = params["embed_w"] * (1.0 / math.sqrt(c_dim))
        y = c.astype(jnp.float32) @ we.T + params["embed_b"]
        y = norm2(y)
        x = jnp.concatenate([x, y], axis=1)

    def fc(x, w, b, in_f):
        w = w * (lr_multiplier / math.sqrt(in_f))
        b = b * lr_multiplier
        h = x @ w.T + b
        return jnp.where(h >= 0, h, h * alpha) * gain

    x = fc(x, params["fc0_w"], params["fc0_b"], z_dim + embed_features)
    for i in range(num_layers - 1):
        x = fc(x, params["fcs_w"][i], params["fcs_b"][i][None, :], layer_features)
    if num_ws is None:
        return x
    return jnp.broadcast_to(x[:, None, :], (x.shape[0], num_ws, w_dim))


if __name__ == "__main__":
    z_dim, c_dim, w_dim, num_ws, num_layers = 32, 8, 32, 8, 8
    batch = 4
    lr_multiplier = 0.01

    key = jax.random.PRNGKey(0)
    kz, kc, kp = jax.random.split(key, 3)
    z = jax.random.normal(kz, (batch, z_dim), jnp.float32)
    c = jax.random.normal(kc, (batch, c_dim), jnp.float32)
    params = init_params(kp, z_dim=z_dim, c_dim=c_dim, w_dim=w_dim,
                         num_layers=num_layers, lr_multiplier=lr_multiplier)

    ref = reference_forward(z, c, params, z_dim=z_dim, c_dim=c_dim, w_dim=w_dim,
                            num_ws=num_ws, num_layers=num_layers,
                            lr_multiplier=lr_multiplier)

    # Strict check with f32 matmul operands (validates layout / gain folding exactly).
    prepped32, meta32 = prepare_params(params, z_dim=z_dim, c_dim=c_dim, w_dim=w_dim,
                                       num_layers=num_layers, lr_multiplier=lr_multiplier,
                                       compute_dtype=jnp.float32)
    out32 = jax.block_until_ready(
        mapping_network_forward(z, c, prepped32, meta32, num_ws=num_ws))
    assert out32.shape == (batch, num_ws, w_dim)
    assert jnp.allclose(out32, ref, atol=1e-4, rtol=1e-4)

    # Fast path: bf16 matmul operands with f32 accumulation (looser tolerance).
    prepped16, meta16 = prepare_params(params, z_dim=z_dim, c_dim=c_dim, w_dim=w_dim,
                                       num_layers=num_layers, lr_multiplier=lr_multiplier,
                                       compute_dtype=jnp.bfloat16)
    out16 = jax.block_until_ready(
        mapping_network_forward(z, c, prepped16, meta16, num_ws=num_ws))
    assert out16.shape == (batch, num_ws, w_dim)
    assert jnp.allclose(out16, ref, atol=0.1, rtol=0.1)

    print("KERNEL_OK")
</pallas_src>

<mosaic_0001>
module attributes {stable_mosaic.version = 11 : i64} {
  func.func @mapping_kernel(%arg0: i32, %arg1: memref<8x32xf32, #tpu.memory_space<vmem>>, %arg2: memref<8x8xf32, #tpu.memory_space<vmem>>, %arg3: memref<8x128xf32, #tpu.memory_space<vmem>>, %arg4: memref<1x128xf32, #tpu.memory_space<vmem>>, %arg5: memref<32x128xf32, #tpu.memory_space<vmem>>, %arg6: memref<128x128xf32, #tpu.memory_space<vmem>>, %arg7: memref<1x128xf32, #tpu.memory_space<vmem>>, %arg8: memref<7x128x128xf32, #tpu.memory_space<vmem>>, %arg9: memref<7x1x128xf32, #tpu.memory_space<vmem>>, %arg10: memref<8x128xf32, #tpu.memory_space<vmem>>) attributes {dimension_semantics = [#tpu.dimension_semantics<parallel>], iteration_bounds = array<i64: 1>, scalar_prefetch = 0 : i64, scratch_operands = 0 : i64, tpu.core_type = #tpu.core_type<tc>, window_params = [{transform_indices = @transform_0, window_bounds = array<i64: 8, 32>}, {transform_indices = @transform_1, window_bounds = array<i64: 8, 8>}, {pipeline_mode = #tpu.pipeline_mode<synchronous>, transform_indices = @transform_2, window_bounds = array<i64: 8, 128>}, {pipeline_mode = #tpu.pipeline_mode<synchronous>, transform_indices = @transform_3, window_bounds = array<i64: 1, 128>}, {pipeline_mode = #tpu.pipeline_mode<synchronous>, transform_indices = @transform_4, window_bounds = array<i64: 32, 128>}, {pipeline_mode = #tpu.pipeline_mode<synchronous>, transform_indices = @transform_5, window_bounds = array<i64: 128, 128>}, {pipeline_mode = #tpu.pipeline_mode<synchronous>, transform_indices = @transform_6, window_bounds = array<i64: 1, 128>}, {pipeline_mode = #tpu.pipeline_mode<synchronous>, transform_indices = @transform_7, window_bounds = array<i64: 7, 128, 128>}, {pipeline_mode = #tpu.pipeline_mode<synchronous>, transform_indices = @transform_8, window_bounds = array<i64: 7, 1, 128>}, {transform_indices = @transform_9, window_bounds = array<i64: 8, 128>}]} {
    %c0 = arith.constant 0 : index
    %c0_0 = arith.constant 0 : index
    %0 = vector.load %arg1[%c0, %c0_0] : memref<8x32xf32, #tpu.memory_space<vmem>>, vector<8x32xf32>
    %1 = arith.mulf %0, %0 : vector<8x32xf32>
    %cst = arith.constant dense<0.000000e+00> : vector<8xf32>
    %2 = vector.multi_reduction <add>, %1, %cst [1] : vector<8x32xf32> to vector<8xf32>
    %3 = vector.shape_cast %2 : vector<8xf32> to vector<8x1xf32>
    %cst_1 = arith.constant 3.200000e+01 : f32
    %4 = vector.broadcast %cst_1 : f32 to vector<8x1xf32>
    %5 = arith.divf %3, %4 : vector<8x1xf32>
    %cst_2 = arith.constant 9.99999993E-9 : f32
    %6 = vector.broadcast %cst_2 : f32 to vector<8x1xf32>
    %7 = arith.addf %5, %6 : vector<8x1xf32>
    %8 = math.rsqrt %7 : vector<8x1xf32>
    %9 = vector.broadcast %8 : vector<8x1xf32> to vector<8x32xf32>
    %10 = arith.mulf %0, %9 : vector<8x32xf32>
    %c0_3 = arith.constant 0 : index
    %c0_4 = arith.constant 0 : index
    %11 = vector.load %arg5[%c0_3, %c0_4] : memref<32x128xf32, #tpu.memory_space<vmem>>, vector<32x128xf32>
    %cst_5 = arith.constant dense<0.000000e+00> : vector<8x128xf32>
    %12 = tpu.matmul %10, %11, %cst_5 {dimension_numbers = #tpu.dot_dimension_numbers<[1], [0], [0], [1], [0, 0, 1, 1], [], []>} : vector<8x32xf32>, vector<32x128xf32>, vector<8x128xf32> -> vector<8x128xf32>
    %c0_6 = arith.constant 0 : index
    %c0_7 = arith.constant 0 : index
    %13 = vector.load %arg2[%c0_6, %c0_7] : memref<8x8xf32, #tpu.memory_space<vmem>>, vector<8x8xf32>
    %c0_8 = arith.constant 0 : index
    %c0_9 = arith.constant 0 : index
    %14 = vector.load %arg3[%c0_8, %c0_9] : memref<8x128xf32, #tpu.memory_space<vmem>>, vector<8x128xf32>
    %cst_10 = arith.constant dense<0.000000e+00> : vector<8x128xf32>
    %15 = tpu.matmul %13, %14, %cst_10 {dimension_numbers = #tpu.dot_dimension_numbers<[1], [0], [0], [1], [0, 0, 1, 1], [], []>} : vector<8x8xf32>, vector<8x128xf32>, vector<8x128xf32> -> vector<8x128xf32>
    %c0_11 = arith.constant 0 : index
    %c0_12 = arith.constant 0 : index
    %16 = vector.load %arg4[%c0_11, %c0_12] : memref<1x128xf32, #tpu.memory_space<vmem>>, vector<1x128xf32>
    %17 = vector.broadcast %16 : vector<1x128xf32> to vector<8x128xf32>
    %18 = arith.addf %15, %17 : vector<8x128xf32>
    %19 = arith.mulf %18, %18 : vector<8x128xf32>
    %cst_13 = arith.constant dense<0.000000e+00> : vector<8xf32>
    %20 = vector.multi_reduction <add>, %19, %cst_13 [1] : vector<8x128xf32> to vector<8xf32>
    %21 = vector.shape_cast %20 : vector<8xf32> to vector<8x1xf32>
    %cst_14 = arith.constant 3.125000e-02 : f32
    %22 = vector.broadcast %cst_14 : f32 to vector<8x1xf32>
    %23 = arith.mulf %21, %22 : vector<8x1xf32>
    %cst_15 = arith.constant 9.99999993E-9 : f32
    %24 = vector.broadcast %cst_15 : f32 to vector<8x1xf32>
    %25 = arith.addf %23, %24 : vector<8x1xf32>
    %26 = math.rsqrt %25 : vector<8x1xf32>
    %27 = vector.broadcast %26 : vector<8x1xf32> to vector<8x128xf32>
    %28 = arith.mulf %18, %27 : vector<8x128xf32>
    %c0_16 = arith.constant 0 : index
    %c0_17 = arith.constant 0 : index
    %29 = vector.load %arg6[%c0_16, %c0_17] : memref<128x128xf32, #tpu.memory_space<vmem>>, vector<128x128xf32>
    %cst_18 = arith.constant dense<0.000000e+00> : vector<8x128xf32>
    %30 = tpu.matmul %28, %29, %cst_18 {dimension_numbers = #tpu.dot_dimension_numbers<[1], [0], [0], [1], [0, 0, 1, 1], [], []>} : vector<8x128xf32>, vector<128x128xf32>, vector<8x128xf32> -> vector<8x128xf32>
    %31 = arith.addf %12, %30 : vector<8x128xf32>
    %c0_19 = arith.constant 0 : index
    %c0_20 = arith.constant 0 : index
    %32 = vector.load %arg7[%c0_19, %c0_20] : memref<1x128xf32, #tpu.memory_space<vmem>>, vector<1x128xf32>
    %33 = vector.broadcast %32 : vector<1x128xf32> to vector<8x128xf32>
    %34 = arith.addf %31, %33 : vector<8x128xf32>
    %cst_21 = arith.constant 2.000000e-01 : f32
    %35 = vector.broadcast %cst_21 : f32 to vector<8x128xf32>
    %36 = arith.mulf %35, %34 : vector<8x128xf32>
    %37 = arith.maximumf %34, %36 : vector<8x128xf32>
    %c0_22 = arith.constant 0 : index
    %c0_23 = arith.constant 0 : index
    %c0_24 = arith.constant 0 : index
    %38 = vector.load %arg8[%c0_22, %c0_23, %c0_24] : memref<7x128x128xf32, #tpu.memory_space<vmem>>, vector<1x128x128xf32>
    %39 = vector.shape_cast %38 : vector<1x128x128xf32> to vector<128x128xf32>
    %cst_25 = arith.constant dense<0.000000e+00> : vector<8x128xf32>
    %40 = tpu.matmul %37, %39, %cst_25 {dimension_numbers = #tpu.dot_dimension_numbers<[1], [0], [0], [1], [0, 0, 1, 1], [], []>} : vector<8x128xf32>, vector<128x128xf32>, vector<8x128xf32> -> vector<8x128xf32>
    %c0_26 = arith.constant 0 : index
    %c0_27 = arith.constant 0 : index
    %c0_28 = arith.constant 0 : index
    %41 = vector.load %arg9[%c0_26, %c0_27, %c0_28] : memref<7x1x128xf32, #tpu.memory_space<vmem>>, vector<1x1x128xf32>
    %42 = vector.shape_cast %41 : vector<1x1x128xf32> to vector<1x128xf32>
    %43 = vector.broadcast %42 : vector<1x128xf32> to vector<8x128xf32>
    %44 = arith.addf %40, %43 : vector<8x128xf32>
    %cst_29 = arith.constant 2.000000e-01 : f32
    %45 = vector.broadcast %cst_29 : f32 to vector<8x128xf32>
    %46 = arith.mulf %45, %44 : vector<8x128xf32>
    %47 = arith.maximumf %44, %46 : vector<8x128xf32>
    %c1 = arith.constant 1 : index
    %c0_30 = arith.constant 0 : index
    %c0_31 = arith.constant 0 : index
    %48 = vector.load %arg8[%c1, %c0_30, %c0_31] : memref<7x128x128xf32, #tpu.memory_space<vmem>>, vector<1x128x128xf32>
    %49 = vector.shape_cast %48 : vector<1x128x128xf32> to vector<128x128xf32>
    %cst_32 = arith.constant dense<0.000000e+00> : vector<8x128xf32>
    %50 = tpu.matmul %47, %49, %cst_32 {dimension_numbers = #tpu.dot_dimension_numbers<[1], [0], [0], [1], [0, 0, 1, 1], [], []>} : vector<8x128xf32>, vector<128x128xf32>, vector<8x128xf32> -> vector<8x128xf32>
    %c1_33 = arith.constant 1 : index
    %c0_34 = arith.constant 0 : index
    %c0_35 = arith.constant 0 : index
    %51 = vector.load %arg9[%c1_33, %c0_34, %c0_35] : memref<7x1x128xf32, #tpu.memory_space<vmem>>, vector<1x1x128xf32>
    %52 = vector.shape_cast %51 : vector<1x1x128xf32> to vector<1x128xf32>
    %53 = vector.broadcast %52 : vector<1x128xf32> to vector<8x128xf32>
    %54 = arith.addf %50, %53 : vector<8x128xf32>
    %cst_36 = arith.constant 2.000000e-01 : f32
    %55 = vector.broadcast %cst_36 : f32 to vector<8x128xf32>
    %56 = arith.mulf %55, %54 : vector<8x128xf32>
    %57 = arith.maximumf %54, %56 : vector<8x128xf32>
    %c2 = arith.constant 2 : index
    %c0_37 = arith.constant 0 : index
    %c0_38 = arith.constant 0 : index
    %58 = vector.load %arg8[%c2, %c0_37, %c0_38] : memref<7x128x128xf32, #tpu.memory_space<vmem>>, vector<1x128x128xf32>
    %59 = vector.shape_cast %58 : vector<1x128x128xf32> to vector<128x128xf32>
    %cst_39 = arith.constant dense<0.000000e+00> : vector<8x128xf32>
    %60 = tpu.matmul %57, %59, %cst_39 {dimension_numbers = #tpu.dot_dimension_numbers<[1], [0], [0], [1], [0, 0, 1, 1], [], []>} : vector<8x128xf32>, vector<128x128xf32>, vector<8x128xf32> -> vector<8x128xf32>
    %c2_40 = arith.constant 2 : index
    %c0_41 = arith.constant 0 : index
    %c0_42 = arith.constant 0 : index
    %61 = vector.load %arg9[%c2_40, %c0_41, %c0_42] : memref<7x1x128xf32, #tpu.memory_space<vmem>>, vector<1x1x128xf32>
    %62 = vector.shape_cast %61 : vector<1x1x128xf32> to vector<1x128xf32>
    %63 = vector.broadcast %62 : vector<1x128xf32> to vector<8x128xf32>
    %64 = arith.addf %60, %63 : vector<8x128xf32>
    %cst_43 = arith.constant 2.000000e-01 : f32
    %65 = vector.broadcast %cst_43 : f32 to vector<8x128xf32>
    %66 = arith.mulf %65, %64 : vector<8x128xf32>
    %67 = arith.maximumf %64, %66 : vector<8x128xf32>
    %c3 = arith.constant 3 : index
    %c0_44 = arith.constant 0 : index
    %c0_45 = arith.constant 0 : index
    %68 = vector.load %arg8[%c3, %c0_44, %c0_45] : memref<7x128x128xf32, #tpu.memory_space<vmem>>, vector<1x128x128xf32>
    %69 = vector.shape_cast %68 : vector<1x128x128xf32> to vector<128x128xf32>
    %cst_46 = arith.constant dense<0.000000e+00> : vector<8x128xf32>
    %70 = tpu.matmul %67, %69, %cst_46 {dimension_numbers = #tpu.dot_dimension_numbers<[1], [0], [0], [1], [0, 0, 1, 1], [], []>} : vector<8x128xf32>, vector<128x128xf32>, vector<8x128xf32> -> vector<8x128xf32>
    %c3_47 = arith.constant 3 : index
    %c0_48 = arith.constant 0 : index
    %c0_49 = arith.constant 0 : index
    %71 = vector.load %arg9[%c3_47, %c0_48, %c0_49] : memref<7x1x128xf32, #tpu.memory_space<vmem>>, vector<1x1x128xf32>
    %72 = vector.shape_cast %71 : vector<1x1x128xf32> to vector<1x128xf32>
    %73 = vector.broadcast %72 : vector<1x128xf32> to vector<8x128xf32>
    %74 = arith.addf %70, %73 : vector<8x128xf32>
    %cst_50 = arith.constant 2.000000e-01 : f32
    %75 = vector.broadcast %cst_50 : f32 to vector<8x128xf32>
    %76 = arith.mulf %75, %74 : vector<8x128xf32>
    %77 = arith.maximumf %74, %76 : vector<8x128xf32>
    %c4 = arith.constant 4 : index
    %c0_51 = arith.constant 0 : index
    %c0_52 = arith.constant 0 : index
    %78 = vector.load %arg8[%c4, %c0_51, %c0_52] : memref<7x128x128xf32, #tpu.memory_space<vmem>>, vector<1x128x128xf32>
    %79 = vector.shape_cast %78 : vector<1x128x128xf32> to vector<128x128xf32>
    %cst_53 = arith.constant dense<0.000000e+00> : vector<8x128xf32>
    %80 = tpu.matmul %77, %79, %cst_53 {dimension_numbers = #tpu.dot_dimension_numbers<[1], [0], [0], [1], [0, 0, 1, 1], [], []>} : vector<8x128xf32>, vector<128x128xf32>, vector<8x128xf32> -> vector<8x128xf32>
    %c4_54 = arith.constant 4 : index
    %c0_55 = arith.constant 0 : index
    %c0_56 = arith.constant 0 : index
    %81 = vector.load %arg9[%c4_54, %c0_55, %c0_56] : memref<7x1x128xf32, #tpu.memory_space<vmem>>, vector<1x1x128xf32>
    %82 = vector.shape_cast %81 : vector<1x1x128xf32> to vector<1x128xf32>
    %83 = vector.broadcast %82 : vector<1x128xf32> to vector<8x128xf32>
    %84 = arith.addf %80, %83 : vector<8x128xf32>
    %cst_57 = arith.constant 2.000000e-01 : f32
    %85 = vector.broadcast %cst_57 : f32 to vector<8x128xf32>
    %86 = arith.mulf %85, %84 : vector<8x128xf32>
    %87 = arith.maximumf %84, %86 : vector<8x128xf32>
    %c5 = arith.constant 5 : index
    %c0_58 = arith.constant 0 : index
    %c0_59 = arith.constant 0 : index
    %88 = vector.load %arg8[%c5, %c0_58, %c0_59] : memref<7x128x128xf32, #tpu.memory_space<vmem>>, vector<1x128x128xf32>
    %89 = vector.shape_cast %88 : vector<1x128x128xf32> to vector<128x128xf32>
    %cst_60 = arith.constant dense<0.000000e+00> : vector<8x128xf32>
    %90 = tpu.matmul %87, %89, %cst_60 {dimension_numbers = #tpu.dot_dimension_numbers<[1], [0], [0], [1], [0, 0, 1, 1], [], []>} : vector<8x128xf32>, vector<128x128xf32>, vector<8x128xf32> -> vector<8x128xf32>
    %c5_61 = arith.constant 5 : index
    %c0_62 = arith.constant 0 : index
    %c0_63 = arith.constant 0 : index
    %91 = vector.load %arg9[%c5_61, %c0_62, %c0_63] : memref<7x1x128xf32, #tpu.memory_space<vmem>>, vector<1x1x128xf32>
    %92 = vector.shape_cast %91 : vector<1x1x128xf32> to vector<1x128xf32>
    %93 = vector.broadcast %92 : vector<1x128xf32> to vector<8x128xf32>
    %94 = arith.addf %90, %93 : vector<8x128xf32>
    %cst_64 = arith.constant 2.000000e-01 : f32
    %95 = vector.broadcast %cst_64 : f32 to vector<8x128xf32>
    %96 = arith.mulf %95, %94 : vector<8x128xf32>
    %97 = arith.maximumf %94, %96 : vector<8x128xf32>
    %c6 = arith.constant 6 : index
    %c0_65 = arith.constant 0 : index
    %c0_66 = arith.constant 0 : index
    %98 = vector.load %arg8[%c6, %c0_65, %c0_66] : memref<7x128x128xf32, #tpu.memory_space<vmem>>, vector<1x128x128xf32>
    %99 = vector.shape_cast %98 : vector<1x128x128xf32> to vector<128x128xf32>
    %cst_67 = arith.constant dense<0.000000e+00> : vector<8x128xf32>
    %100 = tpu.matmul %97, %99, %cst_67 {dimension_numbers = #tpu.dot_dimension_numbers<[1], [0], [0], [1], [0, 0, 1, 1], [], []>} : vector<8x128xf32>, vector<128x128xf32>, vector<8x128xf32> -> vector<8x128xf32>
    %c6_68 = arith.constant 6 : index
    %c0_69 = arith.constant 0 : index
    %c0_70 = arith.constant 0 : index
    %101 = vector.load %arg9[%c6_68, %c0_69, %c0_70] : memref<7x1x128xf32, #tpu.memory_space<vmem>>, vector<1x1x128xf32>
    %102 = vector.shape_cast %101 : vector<1x1x128xf32> to vector<1x128xf32>
    %103 = vector.broadcast %102 : vector<1x128xf32> to vector<8x128xf32>
    %104 = arith.addf %100, %103 : vector<8x128xf32>
    %cst_71 = arith.constant 2.000000e-01 : f32
    %105 = vector.broadcast %cst_71 : f32 to vector<8x128xf32>
    %106 = arith.mulf %105, %104 : vector<8x128xf32>
    %107 = arith.maximumf %104, %106 : vector<8x128xf32>
    %c0_72 = arith.constant 0 : index
    %c0_73 = arith.constant 0 : index
    %108 = vector.load %arg10[%c0_72, %c0_73] : memref<8x128xf32, #tpu.memory_space<vmem>>, vector<8x128xf32>
    tpu.vector_store %arg10[%c0_72, %c0_73], %107 {strides = array<i32>} : memref<8x128xf32, #tpu.memory_space<vmem>>, vector<8x128xf32>,
    return
  }
  func.func @transform_0(%arg0: i32) -> (i32, i32) {
    %c0_i32 = arith.constant 0 : i32
    %c0_i32_0 = arith.constant 0 : i32
    return %arg0, %c0_i32 : i32, i32
  }
  func.func @transform_1(%arg0: i32) -> (i32, i32) {
    %c0_i32 = arith.constant 0 : i32
    %c0_i32_0 = arith.constant 0 : i32
    return %arg0, %c0_i32 : i32, i32
  }
  func.func @transform_2(%arg0: i32) -> (i32, i32) {
    %c0_i32 = arith.constant 0 : i32
    %c0_i32_0 = arith.constant 0 : i32
    %c0_i32_1 = arith.constant 0 : i32
    return %c0_i32, %c0_i32_0 : i32, i32
  }
  func.func @transform_3(%arg0: i32) -> (i32, i32) {
    %c0_i32 = arith.constant 0 : i32
    %c0_i32_0 = arith.constant 0 : i32
    %c0_i32_1 = arith.constant 0 : i32
    return %c0_i32, %c0_i32_0 : i32, i32
  }
  func.func @transform_4(%arg0: i32) -> (i32, i32) {
    %c0_i32 = arith.constant 0 : i32
    %c0_i32_0 = arith.constant 0 : i32
    %c0_i32_1 = arith.constant 0 : i32
    return %c0_i32, %c0_i32_0 : i32, i32
  }
  func.func @transform_5(%arg0: i32) -> (i32, i32) {
    %c0_i32 = arith.constant 0 : i32
    %c0_i32_0 = arith.constant 0 : i32
    %c0_i32_1 = arith.constant 0 : i32
    return %c0_i32, %c0_i32_0 : i32, i32
  }
  func.func @transform_6(%arg0: i32) -> (i32, i32) {
    %c0_i32 = arith.constant 0 : i32
    %c0_i32_0 = arith.constant 0 : i32
    %c0_i32_1 = arith.constant 0 : i32
    return %c0_i32, %c0_i32_0 : i32, i32
  }
  func.func @transform_7(%arg0: i32) -> (i32, i32, i32) {
    %c0_i32 = arith.constant 0 : i32
    %c0_i32_0 = arith.constant 0 : i32
    %c0_i32_1 = arith.constant 0 : i32
    %c0_i32_2 = arith.constant 0 : i32
    return %c0_i32, %c0_i32_0, %c0_i32_1 : i32, i32, i32
  }
  func.func @transform_8(%arg0: i32) -> (i32, i32, i32) {
    %c0_i32 = arith.constant 0 : i32
    %c0_i32_0 = arith.constant 0 : i32
    %c0_i32_1 = arith.constant 0 : i32
    %c0_i32_2 = arith.constant 0 : i32
    return %c0_i32, %c0_i32_0, %c0_i32_1 : i32, i32, i32
  }
  func.func @transform_9(%arg0: i32) -> (i32, i32) {
    %c0_i32 = arith.constant 0 : i32
    %c0_i32_0 = arith.constant 0 : i32
    return %arg0, %c0_i32 : i32, i32
  }
}

module attributes {stable_mosaic.version = 11 : i64} {
  func.func @mapping_kernel(%arg0: i32, %arg1: memref<8x32xf32, #tpu.memory_space<vmem>>, %arg2: memref<8x8xf32, #tpu.memory_space<vmem>>, %arg3: memref<8x128xf32, #tpu.memory_space<vmem>>, %arg4: memref<1x128xf32, #tpu.memory_space<vmem>>, %arg5: memref<32x128xf32, #tpu.memory_space<vmem>>, %arg6: memref<128x128xf32, #tpu.memory_space<vmem>>, %arg7: memref<1x128xf32, #tpu.memory_space<vmem>>, %arg8: memref<7x128x128xf32, #tpu.memory_space<vmem>>, %arg9: memref<7x1x128xf32, #tpu.memory_space<vmem>>, %arg10: memref<8x128xf32, #tpu.memory_space<vmem>>) attributes {dimension_semantics = [#tpu.dimension_semantics<parallel>], iteration_bounds = array<i64: 1>, scalar_prefetch = 0 : i64, scratch_operands = 0 : i64, tpu.core_type = #tpu.core_type<tc>, window_params = [{transform_indices = @transform_0, window_bounds = array<i64: 8, 32>}, {transform_indices = @transform_1, window_bounds = array<i64: 8, 8>}, {pipeline_mode = #tpu.pipeline_mode<synchronous>, transform_indices = @transform_2, window_bounds = array<i64: 8, 128>}, {pipeline_mode = #tpu.pipeline_mode<synchronous>, transform_indices = @transform_3, window_bounds = array<i64: 1, 128>}, {pipeline_mode = #tpu.pipeline_mode<synchronous>, transform_indices = @transform_4, window_bounds = array<i64: 32, 128>}, {pipeline_mode = #tpu.pipeline_mode<synchronous>, transform_indices = @transform_5, window_bounds = array<i64: 128, 128>}, {pipeline_mode = #tpu.pipeline_mode<synchronous>, transform_indices = @transform_6, window_bounds = array<i64: 1, 128>}, {pipeline_mode = #tpu.pipeline_mode<synchronous>, transform_indices = @transform_7, window_bounds = array<i64: 7, 128, 128>}, {pipeline_mode = #tpu.pipeline_mode<synchronous>, transform_indices = @transform_8, window_bounds = array<i64: 7, 1, 128>}, {transform_indices = @transform_9, window_bounds = array<i64: 8, 128>}]} {
    %c0 = arith.constant 0 : index
    %c0_0 = arith.constant 0 : index
    %0 = vector.load %arg1[%c0, %c0_0] : memref<8x32xf32, #tpu.memory_space<vmem>>, vector<8x32xf32>
    %1 = arith.mulf %0, %0 : vector<8x32xf32>
    %cst = arith.constant dense<0.000000e+00> : vector<8xf32>
    %2 = vector.multi_reduction <add>, %1, %cst [1] : vector<8x32xf32> to vector<8xf32>
    %3 = vector.shape_cast %2 : vector<8xf32> to vector<8x1xf32>
    %cst_1 = arith.constant 3.200000e+01 : f32
    %4 = vector.broadcast %cst_1 : f32 to vector<8x1xf32>
    %5 = arith.divf %3, %4 : vector<8x1xf32>
    %cst_2 = arith.constant 9.99999993E-9 : f32
    %6 = vector.broadcast %cst_2 : f32 to vector<8x1xf32>
    %7 = arith.addf %5, %6 : vector<8x1xf32>
    %8 = math.rsqrt %7 : vector<8x1xf32>
    %9 = vector.broadcast %8 : vector<8x1xf32> to vector<8x32xf32>
    %10 = arith.mulf %0, %9 : vector<8x32xf32>
    %c0_3 = arith.constant 0 : index
    %c0_4 = arith.constant 0 : index
    %11 = vector.load %arg5[%c0_3, %c0_4] : memref<32x128xf32, #tpu.memory_space<vmem>>, vector<32x128xf32>
    %cst_5 = arith.constant dense<0.000000e+00> : vector<8x128xf32>
    %12 = tpu.matmul %10, %11, %cst_5 {dimension_numbers = #tpu.dot_dimension_numbers<[1], [0], [0], [1], [0, 0, 1, 1], [], []>} : vector<8x32xf32>, vector<32x128xf32>, vector<8x128xf32> -> vector<8x128xf32>
    %c0_6 = arith.constant 0 : index
    %c0_7 = arith.constant 0 : index
    %13 = vector.load %arg2[%c0_6, %c0_7] : memref<8x8xf32, #tpu.memory_space<vmem>>, vector<8x8xf32>
    %c0_8 = arith.constant 0 : index
    %c0_9 = arith.constant 0 : index
    %14 = vector.load %arg3[%c0_8, %c0_9] : memref<8x128xf32, #tpu.memory_space<vmem>>, vector<8x128xf32>
    %cst_10 = arith.constant dense<0.000000e+00> : vector<8x128xf32>
    %15 = tpu.matmul %13, %14, %cst_10 {dimension_numbers = #tpu.dot_dimension_numbers<[1], [0], [0], [1], [0, 0, 1, 1], [], []>} : vector<8x8xf32>, vector<8x128xf32>, vector<8x128xf32> -> vector<8x128xf32>
    %c0_11 = arith.constant 0 : index
    %c0_12 = arith.constant 0 : index
    %16 = vector.load %arg4[%c0_11, %c0_12] : memref<1x128xf32, #tpu.memory_space<vmem>>, vector<1x128xf32>
    %17 = vector.broadcast %16 : vector<1x128xf32> to vector<8x128xf32>
    %18 = arith.addf %15, %17 : vector<8x128xf32>
    %19 = arith.mulf %18, %18 : vector<8x128xf32>
    %cst_13 = arith.constant dense<0.000000e+00> : vector<8xf32>
    %20 = vector.multi_reduction <add>, %19, %cst_13 [1] : vector<8x128xf32> to vector<8xf32>
    %21 = vector.shape_cast %20 : vector<8xf32> to vector<8x1xf32>
    %cst_14 = arith.constant 3.125000e-02 : f32
    %22 = vector.broadcast %cst_14 : f32 to vector<8x1xf32>
    %23 = arith.mulf %21, %22 : vector<8x1xf32>
    %cst_15 = arith.constant 9.99999993E-9 : f32
    %24 = vector.broadcast %cst_15 : f32 to vector<8x1xf32>
    %25 = arith.addf %23, %24 : vector<8x1xf32>
    %26 = math.rsqrt %25 : vector<8x1xf32>
    %27 = vector.broadcast %26 : vector<8x1xf32> to vector<8x128xf32>
    %28 = arith.mulf %18, %27 : vector<8x128xf32>
    %c0_16 = arith.constant 0 : index
    %c0_17 = arith.constant 0 : index
    %29 = vector.load %arg6[%c0_16, %c0_17] : memref<128x128xf32, #tpu.memory_space<vmem>>, vector<128x128xf32>
    %cst_18 = arith.constant dense<0.000000e+00> : vector<8x128xf32>
    %30 = tpu.matmul %28, %29, %cst_18 {dimension_numbers = #tpu.dot_dimension_numbers<[1], [0], [0], [1], [0, 0, 1, 1], [], []>} : vector<8x128xf32>, vector<128x128xf32>, vector<8x128xf32> -> vector<8x128xf32>
    %31 = arith.addf %12, %30 : vector<8x128xf32>
    %c0_19 = arith.constant 0 : index
    %c0_20 = arith.constant 0 : index
    %32 = vector.load %arg7[%c0_19, %c0_20] : memref<1x128xf32, #tpu.memory_space<vmem>>, vector<1x128xf32>
    %33 = vector.broadcast %32 : vector<1x128xf32> to vector<8x128xf32>
    %34 = arith.addf %31, %33 : vector<8x128xf32>
    %cst_21 = arith.constant 2.000000e-01 : f32
    %35 = vector.broadcast %cst_21 : f32 to vector<8x128xf32>
    %36 = arith.mulf %35, %34 : vector<8x128xf32>
    %37 = arith.maximumf %34, %36 : vector<8x128xf32>
    %c0_22 = arith.constant 0 : index
    %c0_23 = arith.constant 0 : index
    %c0_24 = arith.constant 0 : index
    %38 = vector.load %arg8[%c0_22, %c0_23, %c0_24] : memref<7x128x128xf32, #tpu.memory_space<vmem>>, vector<1x128x128xf32>
    %39 = vector.shape_cast %38 : vector<1x128x128xf32> to vector<128x128xf32>
    %cst_25 = arith.constant dense<0.000000e+00> : vector<8x128xf32>
    %40 = tpu.matmul %37, %39, %cst_25 {dimension_numbers = #tpu.dot_dimension_numbers<[1], [0], [0], [1], [0, 0, 1, 1], [], []>} : vector<8x128xf32>, vector<128x128xf32>, vector<8x128xf32> -> vector<8x128xf32>
    %c0_26 = arith.constant 0 : index
    %c0_27 = arith.constant 0 : index
    %c0_28 = arith.constant 0 : index
    %41 = vector.load %arg9[%c0_26, %c0_27, %c0_28] : memref<7x1x128xf32, #tpu.memory_space<vmem>>, vector<1x1x128xf32>
    %42 = vector.shape_cast %41 : vector<1x1x128xf32> to vector<1x128xf32>
    %43 = vector.broadcast %42 : vector<1x128xf32> to vector<8x128xf32>
    %44 = arith.addf %40, %43 : vector<8x128xf32>
    %cst_29 = arith.constant 2.000000e-01 : f32
    %45 = vector.broadcast %cst_29 : f32 to vector<8x128xf32>
    %46 = arith.mulf %45, %44 : vector<8x128xf32>
    %47 = arith.maximumf %44, %46 : vector<8x128xf32>
    %c1 = arith.constant 1 : index
    %c0_30 = arith.constant 0 : index
    %c0_31 = arith.constant 0 : index
    %48 = vector.load %arg8[%c1, %c0_30, %c0_31] : memref<7x128x128xf32, #tpu.memory_space<vmem>>, vector<1x128x128xf32>
    %49 = vector.shape_cast %48 : vector<1x128x128xf32> to vector<128x128xf32>
    %cst_32 = arith.constant dense<0.000000e+00> : vector<8x128xf32>
    %50 = tpu.matmul %47, %49, %cst_32 {dimension_numbers = #tpu.dot_dimension_numbers<[1], [0], [0], [1], [0, 0, 1, 1], [], []>} : vector<8x128xf32>, vector<128x128xf32>, vector<8x128xf32> -> vector<8x128xf32>
    %c1_33 = arith.constant 1 : index
    %c0_34 = arith.constant 0 : index
    %c0_35 = arith.constant 0 : index
    %51 = vector.load %arg9[%c1_33, %c0_34, %c0_35] : memref<7x1x128xf32, #tpu.memory_space<vmem>>, vector<1x1x128xf32>
    %52 = vector.shape_cast %51 : vector<1x1x128xf32> to vector<1x128xf32>
    %53 = vector.broadcast %52 : vector<1x128xf32> to vector<8x128xf32>
    %54 = arith.addf %50, %53 : vector<8x128xf32>
    %cst_36 = arith.constant 2.000000e-01 : f32
    %55 = vector.broadcast %cst_36 : f32 to vector<8x128xf32>
    %56 = arith.mulf %55, %54 : vector<8x128xf32>
    %57 = arith.maximumf %54, %56 : vector<8x128xf32>
    %c2 = arith.constant 2 : index
    %c0_37 = arith.constant 0 : index
    %c0_38 = arith.constant 0 : index
    %58 = vector.load %arg8[%c2, %c0_37, %c0_38] : memref<7x128x128xf32, #tpu.memory_space<vmem>>, vector<1x128x128xf32>
    %59 = vector.shape_cast %58 : vector<1x128x128xf32> to vector<128x128xf32>
    %cst_39 = arith.constant dense<0.000000e+00> : vector<8x128xf32>
    %60 = tpu.matmul %57, %59, %cst_39 {dimension_numbers = #tpu.dot_dimension_numbers<[1], [0], [0], [1], [0, 0, 1, 1], [], []>} : vector<8x128xf32>, vector<128x128xf32>, vector<8x128xf32> -> vector<8x128xf32>
    %c2_40 = arith.constant 2 : index
    %c0_41 = arith.constant 0 : index
    %c0_42 = arith.constant 0 : index
    %61 = vector.load %arg9[%c2_40, %c0_41, %c0_42] : memref<7x1x128xf32, #tpu.memory_space<vmem>>, vector<1x1x128xf32>
    %62 = vector.shape_cast %61 : vector<1x1x128xf32> to vector<1x128xf32>
    %63 = vector.broadcast %62 : vector<1x128xf32> to vector<8x128xf32>
    %64 = arith.addf %60, %63 : vector<8x128xf32>
    %cst_43 = arith.constant 2.000000e-01 : f32
    %65 = vector.broadcast %cst_43 : f32 to vector<8x128xf32>
    %66 = arith.mulf %65, %64 : vector<8x128xf32>
    %67 = arith.maximumf %64, %66 : vector<8x128xf32>
    %c3 = arith.constant 3 : index
    %c0_44 = arith.constant 0 : index
    %c0_45 = arith.constant 0 : index
    %68 = vector.load %arg8[%c3, %c0_44, %c0_45] : memref<7x128x128xf32, #tpu.memory_space<vmem>>, vector<1x128x128xf32>
    %69 = vector.shape_cast %68 : vector<1x128x128xf32> to vector<128x128xf32>
    %cst_46 = arith.constant dense<0.000000e+00> : vector<8x128xf32>
    %70 = tpu.matmul %67, %69, %cst_46 {dimension_numbers = #tpu.dot_dimension_numbers<[1], [0], [0], [1], [0, 0, 1, 1], [], []>} : vector<8x128xf32>, vector<128x128xf32>, vector<8x128xf32> -> vector<8x128xf32>
    %c3_47 = arith.constant 3 : index
    %c0_48 = arith.constant 0 : index
    %c0_49 = arith.constant 0 : index
    %71 = vector.load %arg9[%c3_47, %c0_48, %c0_49] : memref<7x1x128xf32, #tpu.memory_space<vmem>>, vector<1x1x128xf32>
    %72 = vector.shape_cast %71 : vector<1x1x128xf32> to vector<1x128xf32>
    %73 = vector.broadcast %72 : vector<1x128xf32> to vector<8x128xf32>
    %74 = arith.addf %70, %73 : vector<8x128xf32>
    %cst_50 = arith.constant 2.000000e-01 : f32
    %75 = vector.broadcast %cst_50 : f32 to vector<8x128xf32>
    %76 = arith.mulf %75, %74 : vector<8x128xf32>
    %77 = arith.maximumf %74, %76 : vector<8x128xf32>
    %c4 = arith.constant 4 : index
    %c0_51 = arith.constant 0 : index
    %c0_52 = arith.constant 0 : index
    %78 = vector.load %arg8[%c4, %c0_51, %c0_52] : memref<7x128x128xf32, #tpu.memory_space<vmem>>, vector<1x128x128xf32>
    %79 = vector.shape_cast %78 : vector<1x128x128xf32> to vector<128x128xf32>
    %cst_53 = arith.constant dense<0.000000e+00> : vector<8x128xf32>
    %80 = tpu.matmul %77, %79, %cst_53 {dimension_numbers = #tpu.dot_dimension_numbers<[1], [0], [0], [1], [0, 0, 1, 1], [], []>} : vector<8x128xf32>, vector<128x128xf32>, vector<8x128xf32> -> vector<8x128xf32>
    %c4_54 = arith.constant 4 : index
    %c0_55 = arith.constant 0 : index
    %c0_56 = arith.constant 0 : index
    %81 = vector.load %arg9[%c4_54, %c0_55, %c0_56] : memref<7x1x128xf32, #tpu.memory_space<vmem>>, vector<1x1x128xf32>
    %82 = vector.shape_cast %81 : vector<1x1x128xf32> to vector<1x128xf32>
    %83 = vector.broadcast %82 : vector<1x128xf32> to vector<8x128xf32>
    %84 = arith.addf %80, %83 : vector<8x128xf32>
    %cst_57 = arith.constant 2.000000e-01 : f32
    %85 = vector.broadcast %cst_57 : f32 to vector<8x128xf32>
    %86 = arith.mulf %85, %84 : vector<8x128xf32>
    %87 = arith.maximumf %84, %86 : vector<8x128xf32>
    %c5 = arith.constant 5 : index
    %c0_58 = arith.constant 0 : index
    %c0_59 = arith.constant 0 : index
    %88 = vector.load %arg8[%c5, %c0_58, %c0_59] : memref<7x128x128xf32, #tpu.memory_space<vmem>>, vector<1x128x128xf32>
    %89 = vector.shape_cast %88 : vector<1x128x128xf32> to vector<128x128xf32>
    %cst_60 = arith.constant dense<0.000000e+00> : vector<8x128xf32>
    %90 = tpu.matmul %87, %89, %cst_60 {dimension_numbers = #tpu.dot_dimension_numbers<[1], [0], [0], [1], [0, 0, 1, 1], [], []>} : vector<8x128xf32>, vector<128x128xf32>, vector<8x128xf32> -> vector<8x128xf32>
    %c5_61 = arith.constant 5 : index
    %c0_62 = arith.constant 0 : index
    %c0_63 = arith.constant 0 : index
    %91 = vector.load %arg9[%c5_61, %c0_62, %c0_63] : memref<7x1x128xf32, #tpu.memory_space<vmem>>, vector<1x1x128xf32>
    %92 = vector.shape_cast %91 : vector<1x1x128xf32> to vector<1x128xf32>
    %93 = vector.broadcast %92 : vector<1x128xf32> to vector<8x128xf32>
    %94 = arith.addf %90, %93 : vector<8x128xf32>
    %cst_64 = arith.constant 2.000000e-01 : f32
    %95 = vector.broadcast %cst_64 : f32 to vector<8x128xf32>
    %96 = arith.mulf %95, %94 : vector<8x128xf32>
    %97 = arith.maximumf %94, %96 : vector<8x128xf32>
    %c6 = arith.constant 6 : index
    %c0_65 = arith.constant 0 : index
    %c0_66 = arith.constant 0 : index
    %98 = vector.load %arg8[%c6, %c0_65, %c0_66] : memref<7x128x128xf32, #tpu.memory_space<vmem>>, vector<1x128x128xf32>
    %99 = vector.shape_cast %98 : vector<1x128x128xf32> to vector<128x128xf32>
    %cst_67 = arith.constant dense<0.000000e+00> : vector<8x128xf32>
    %100 = tpu.matmul %97, %99, %cst_67 {dimension_numbers = #tpu.dot_dimension_numbers<[1], [0], [0], [1], [0, 0, 1, 1], [], []>} : vector<8x128xf32>, vector<128x128xf32>, vector<8x128xf32> -> vector<8x128xf32>
    %c6_68 = arith.constant 6 : index
    %c0_69 = arith.constant 0 : index
    %c0_70 = arith.constant 0 : index
    %101 = vector.load %arg9[%c6_68, %c0_69, %c0_70] : memref<7x1x128xf32, #tpu.memory_space<vmem>>, vector<1x1x128xf32>
    %102 = vector.shape_cast %101 : vector<1x1x128xf32> to vector<1x128xf32>
    %103 = vector.broadcast %102 : vector<1x128xf32> to vector<8x128xf32>
    %104 = arith.addf %100, %103 : vector<8x128xf32>
    %cst_71 = arith.constant 2.000000e-01 : f32
    %105 = vector.broadcast %cst_71 : f32 to vector<8x128xf32>
    %106 = arith.mulf %105, %104 : vector<8x128xf32>
    %107 = arith.maximumf %104, %106 : vector<8x128xf32>
    %c0_72 = arith.constant 0 : index
    %c0_73 = arith.constant 0 : index
    %108 = vector.load %arg10[%c0_72, %c0_73] : memref<8x128xf32, #tpu.memory_space<vmem>>, vector<8x128xf32>
    tpu.vector_store %arg10[%c0_72, %c0_73], %107 {strides = array<i32>} : memref<8x128xf32, #tpu.memory_space<vmem>>, vector<8x128xf32>,
    return
  }
  func.func @transform_0(%arg0: i32) -> (i32, i32) {
    %c0_i32 = arith.constant 0 : i32
    %c0_i32_0 = arith.constant 0 : i32
    return %arg0, %c0_i32 : i32, i32
  }
  func.func @transform_1(%arg0: i32) -> (i32, i32) {
    %c0_i32 = arith.constant 0 : i32
    %c0_i32_0 = arith.constant 0 : i32
    return %arg0, %c0_i32 : i32, i32
  }
  func.func @transform_2(%arg0: i32) -> (i32, i32) {
    %c0_i32 = arith.constant 0 : i32
    %c0_i32_0 = arith.constant 0 : i32
    %c0_i32_1 = arith.constant 0 : i32
    return %c0_i32, %c0_i32_0 : i32, i32
  }
  func.func @transform_3(%arg0: i32) -> (i32, i32) {
    %c0_i32 = arith.constant 0 : i32
    %c0_i32_0 = arith.constant 0 : i32
    %c0_i32_1 = arith.constant 0 : i32
    return %c0_i32, %c0_i32_0 : i32, i32
  }
  func.func @transform_4(%arg0: i32) -> (i32, i32) {
    %c0_i32 = arith.constant 0 : i32
    %c0_i32_0 = arith.constant 0 : i32
    %c0_i32_1 = arith.constant 0 : i32
    return %c0_i32, %c0_i32_0 : i32, i32
  }
  func.func @transform_5(%arg0: i32) -> (i32, i32) {
    %c0_i32 = arith.constant 0 : i32
    %c0_i32_0 = arith.constant 0 : i32
    %c0_i32_1 = arith.constant 0 : i32
    return %c0_i32, %c0_i32_0 : i32, i32
  }
  func.func @transform_6(%arg0: i32) -> (i32, i32) {
    %c0_i32 = arith.constant 0 : i32
    %c0_i32_0 = arith.constant 0 : i32
    %c0_i32_1 = arith.constant 0 : i32
    return %c0_i32, %c0_i32_0 : i32, i32
  }
  func.func @transform_7(%arg0: i32) -> (i32, i32, i32) {
    %c0_i32 = arith.constant 0 : i32
    %c0_i32_0 = arith.constant 0 : i32
    %c0_i32_1 = arith.constant 0 : i32
    %c0_i32_2 = arith.constant 0 : i32
    return %c0_i32, %c0_i32_0, %c0_i32_1 : i32, i32, i32
  }
  func.func @transform_8(%arg0: i32) -> (i32, i32, i32) {
    %c0_i32 = arith.constant 0 : i32
    %c0_i32_0 = arith.constant 0 : i32
    %c0_i32_1 = arith.constant 0 : i32
    %c0_i32_2 = arith.constant 0 : i32
    return %c0_i32, %c0_i32_0, %c0_i32_1 : i32, i32, i32
  }
  func.func @transform_9(%arg0: i32) -> (i32, i32) {
    %c0_i32 = arith.constant 0 : i32
    %c0_i32_0 = arith.constant 0 : i32
    return %arg0, %c0_i32 : i32, i32
  }
}

</mosaic_0001>

<llo_original>
// kernel: tpu_custom_call.1
$region0: #{tpu_custom_call.1}
  #allocation0 [shape = 'u32[]', space=smem, size = 0x4, offset = 0x4, fixed_abs, tag = 'smem constant byte address 0x4 - core index']
  #allocation1 [shape = 'u32[144,128]{1,0:T(1,128)}', space=vmem, size = 0x12000, scoped, tag = 'internal scratch']
  %s0 = inlined_call_operand.hbm [shape: f32[8,32], index: 0, kind: input, shape index: {}]
  %s1 = inlined_call_operand.hbm [shape: f32[8,8], index: 1, kind: input, shape index: {}]
  %s2 = inlined_call_operand.hbm [shape: f32[8,128], index: 2, kind: input, shape index: {}]
  %s3 = inlined_call_operand.vmem [shape: f32[1,128], index: 3, kind: input, shape index: {}]
  %s4 = inlined_call_operand.hbm [shape: f32[32,128], index: 4, kind: input, shape index: {}]
  %s5 = inlined_call_operand.hbm [shape: f32[128,128], index: 5, kind: input, shape index: {}]
  %s6 = inlined_call_operand.vmem [shape: f32[1,128], index: 6, kind: input, shape index: {}]
  %s7 = inlined_call_operand.hbm [shape: f32[7,128,128], index: 7, kind: input, shape index: {}]
  %s8 = inlined_call_operand.vmem [shape: f32[7,1,128], index: 8, kind: input, shape index: {}]
  %s9 = inlined_call_operand.hbm [shape: f32[8,128], index: 9, kind: output, shape index: {}]
  %s10 = sld [smem:[#allocation0]]
  $region70: #{tpu_custom_call.1} parent=0
    _
  %s12 = ssub.s32 1, %s10
  %s13 = scalar_select 0, %s12, %s10
  $region1: #{tpu_custom_call.1} parent=0
    #allocation2 [shape = 'u8[4096]{0}', space=vmem, size = 0x1000, scoped, tag = 'input window, operand 0, single buffered']
    #allocation3 [shape = 's32[1]{0}', space=sflag, size = 0x4, scoped, tag = 'scoped memory for tpu_custom_call.1']
    #allocation4 [shape = 's32[1]{0}', space=sflag, size = 0x4, scoped, tag = 'scoped memory for tpu_custom_call.1']
    #allocation5 [shape = 'u8[4096]{0}', space=vmem, size = 0x1000, scoped, tag = 'input window, operand 1, single buffered']
    #allocation6 [shape = 's32[1]{0}', space=sflag, size = 0x4, scoped, tag = 'scoped memory for tpu_custom_call.1']
    #allocation7 [shape = 'u8[4096]{0}', space=vmem, size = 0x1000, scoped, tag = 'input window, operand 2, single buffered']
    #allocation8 [shape = 'u8[16384]{0}', space=vmem, size = 0x4000, scoped, tag = 'input window, operand 4, single buffered']
    #allocation9 [shape = 's32[1]{0}', space=sflag, size = 0x4, scoped, tag = 'scoped memory for tpu_custom_call.1']
    #allocation10 [shape = 'u8[65536]{0}', space=vmem, size = 0x10000, scoped, tag = 'input window, operand 5, single buffered']
    #allocation11 [shape = 'u8[458752]{0}', space=vmem, size = 0x70000, scoped, tag = 'input window, operand 7, single buffered']
    #allocation12 [shape = 's32[1]{0}', space=sflag, size = 0x4, scoped, tag = 'scoped memory for tpu_custom_call.1']
    #allocation13 [shape = 'u8[4096]{0}', space=vmem, size = 0x1000, scoped, tag = 'output window, operand 0, single buffered']
    %14 = vsyncpa [#allocation3], 0
    %15 = vsyncpa [#allocation6], 0
    %16 = vsyncpa [#allocation9], 0
    %17 = vsyncpa [#allocation12], 0
    %18 = vsyncpa [#allocation4], 0
    // Predicated region
    $region2: #{tpu_custom_call.1} parent=1 // pred_check
      _
    $region3: #{tpu_custom_call.1} parent=1 // pred_check_branch
      %20 = sbr.rel (0) target = $region5
    $region4: #{tpu_custom_call.1} parent=1 // pred_region
      %s22 = ssub.s32 128, 128
      %23 = vsyncadd [#allocation3], %s22
      %s25 = sshll.u32 [#allocation2], 4
      %s26 = int_to_ptr.vmem [resolvable:$true] %s25
      %28 = dma.hbm_to_vmem [thread:$0]  %s0, 128, %s26, [#allocation3]
    $region5: #{tpu_custom_call.1} parent=1 // pred_fallthru
      _
    // Predicated region
    $region6: #{tpu_custom_call.1} parent=1 // pred_check
      _
    $region7: #{tpu_custom_call.1} parent=1 // pred_check_branch
      %30 = sbr.rel (0) target = $region9
    $region8: #{tpu_custom_call.1} parent=1 // pred_region
      %s32 = ssub.s32 128, 128
      %33 = vsyncadd [#allocation6], %s32
      %s35 = sshll.u32 [#allocation5], 4
      %s36 = int_to_ptr.vmem [resolvable:$true] %s35
      %38 = dma.hbm_to_vmem [thread:$0]  %s1, 128, %s36, [#allocation6]
    $region9: #{tpu_custom_call.1} parent=1 // pred_fallthru
      _
    // Predicated region
    $region10: #{tpu_custom_call.1} parent=1 // pred_check
      _
    $region11: #{tpu_custom_call.1} parent=1 // pred_check_branch
      %40 = sbr.rel (0) target = $region13
    $region12: #{tpu_custom_call.1} parent=1 // pred_region
      %s42 = ssub.s32 128, 128
      %43 = vsyncadd [#allocation6], %s42
      %s45 = sshll.u32 [#allocation7], 4
      %s46 = int_to_ptr.vmem [resolvable:$true] %s45
      %48 = dma.hbm_to_vmem [thread:$0]  %s2, 128, %s46, [#allocation6]
    $region13: #{tpu_custom_call.1} parent=1 // pred_fallthru
      _
    // Predicated region
    $region14: #{tpu_custom_call.1} parent=1 // pred_check
      _
    $region15: #{tpu_custom_call.1} parent=1 // pred_check_branch
      %50 = sbr.rel (0) target = $region17
    $region16: #{tpu_custom_call.1} parent=1 // pred_region
      _
    $region17: #{tpu_custom_call.1} parent=1 // pred_fallthru
      _
    // Predicated region
    $region18: #{tpu_custom_call.1} parent=1 // pred_check
      _
    $region19: #{tpu_custom_call.1} parent=1 // pred_check_branch
      %52 = sbr.rel (0) target = $region21
    $region20: #{tpu_custom_call.1} parent=1 // pred_region
      %s54 = ssub.s32 512, 512
      %55 = vsyncadd [#allocation9], %s54
      %s56 = sshll.u32 [#allocation8], 4
      %s57 = int_to_ptr.vmem [resolvable:$true] %s56
      %62 = dma.hbm_to_vmem [thread:$0]  %s4, 512, %s57, [#allocation9], 128, 128, 8
    $region21: #{tpu_custom_call.1} parent=1 // pred_fallthru
      _
    // Predicated region
    $region22: #{tpu_custom_call.1} parent=1 // pred_check
      _
    $region23: #{tpu_custom_call.1} parent=1 // pred_check_branch
      %64 = sbr.rel (0) target = $region25
    $region24: #{tpu_custom_call.1} parent=1 // pred_region
      %s66 = ssub.s32 2048, 2048
      %67 = vsyncadd [#allocation9], %s66
      %s68 = sshll.u32 [#allocation10], 4
      %s69 = int_to_ptr.vmem [resolvable:$true] %s68
      %74 = dma.hbm_to_vmem [thread:$0]  %s5, 2048, %s69, [#allocation9], 128, 128, 8
    $region25: #{tpu_custom_call.1} parent=1 // pred_fallthru
      _
    // Predicated region
    $region26: #{tpu_custom_call.1} parent=1 // pred_check
      _
    $region27: #{tpu_custom_call.1} parent=1 // pred_check_branch
      %76 = sbr.rel (0) target = $region29
    $region28: #{tpu_custom_call.1} parent=1 // pred_region
      _
    $region29: #{tpu_custom_call.1} parent=1 // pred_fallthru
      _
    // Predicated region
    $region30: #{tpu_custom_call.1} parent=1 // pred_check
      _
    $region31: #{tpu_custom_call.1} parent=1 // pred_check_branch
      %78 = sbr.rel (0) target = $region33
    $region32: #{tpu_custom_call.1} parent=1 // pred_region
      %s80 = ssub.s32 14336, 14336
      %81 = vsyncadd [#allocation12], %s80
      %s82 = sshll.u32 [#allocation11], 4
      %s83 = int_to_ptr.vmem [resolvable:$true] %s82
      %88 = dma.hbm_to_vmem [thread:$0]  %s7, 14336, %s83, [#allocation12], 128, 128, 8
    $region33: #{tpu_custom_call.1} parent=1 // pred_fallthru
      _
    // Predicated region
    $region34: #{tpu_custom_call.1} parent=1 // pred_check
      _
    $region35: #{tpu_custom_call.1} parent=1 // pred_check_branch
      %90 = sbr.rel (0) target = $region37
    $region36: #{tpu_custom_call.1} parent=1 // pred_region
      _
    $region37: #{tpu_custom_call.1} parent=1 // pred_fallthru
      _
    // Predicated region
    $region38: #{tpu_custom_call.1} parent=1 // pred_check
      _
    $region39: #{tpu_custom_call.1} parent=1 // pred_check_branch
      %92 = sbr.rel (0) target = $region41
    $region40: #{tpu_custom_call.1} parent=1 // pred_region
      %93 = dma.done [#allocation3], 128
    $region41: #{tpu_custom_call.1} parent=1 // pred_fallthru
      _
    // Predicated region
    $region42: #{tpu_custom_call.1} parent=1 // pred_check
      _
    $region43: #{tpu_custom_call.1} parent=1 // pred_check_branch
      %95 = sbr.rel (0) target = $region45
    $region44: #{tpu_custom_call.1} parent=1 // pred_region
      %96 = dma.done [#allocation6], 128
    $region45: #{tpu_custom_call.1} parent=1 // pred_fallthru
      _
    // Predicated region
    $region46: #{tpu_custom_call.1} parent=1 // pred_check
      _
    $region47: #{tpu_custom_call.1} parent=1 // pred_check_branch
      %98 = sbr.rel (0) target = $region49
    $region48: #{tpu_custom_call.1} parent=1 // pred_region
      %99 = dma.done [#allocation6], 128
    $region49: #{tpu_custom_call.1} parent=1 // pred_fallthru
      _
    // Predicated region
    $region50: #{tpu_custom_call.1} parent=1 // pred_check
      _
    $region51: #{tpu_custom_call.1} parent=1 // pred_check_branch
      %101 = sbr.rel (0) target = $region53
    $region52: #{tpu_custom_call.1} parent=1 // pred_region
      %102 = dma.done [#allocation9], 512
    $region53: #{tpu_custom_call.1} parent=1 // pred_fallthru
      _
    // Predicated region
    $region54: #{tpu_custom_call.1} parent=1 // pred_check
      _
    $region55: #{tpu_custom_call.1} parent=1 // pred_check_branch
      %104 = sbr.rel (0) target = $region57
    $region56: #{tpu_custom_call.1} parent=1 // pred_region
      %105 = dma.done [#allocation9], 2048
    $region57: #{tpu_custom_call.1} parent=1 // pred_fallthru
      _
    // Predicated region
    $region58: #{tpu_custom_call.1} parent=1 // pred_check
      _
    $region59: #{tpu_custom_call.1} parent=1 // pred_check_branch
      %107 = sbr.rel (0) target = $region61
    $region60: #{tpu_custom_call.1} parent=1 // pred_region
      %108 = dma.done [#allocation12], 14336
    $region61: #{tpu_custom_call.1} parent=1 // pred_fallthru
      _
    %v109 = vld [vmem:[#allocation2] sm:$0xff]
    %v110 = vmul.f32 %v109, %v109
    %vm111 = vcmask 261120
    %v112 = vsel %vm111, %v110, 0.0
    %113 = vadd.xlane.f32.xlu0 %v112
    %v114 = vpop.xlane.xlu0 %113
    %v115 = vrcp.pop 32.0
    %v116 = vmul.f32 %v114, %v115
    %v117 = vadd.f32 %v116, 1e-08
    %v118 = vrsqrt.pop %v117
    %v119 = vmul.f32 %v109, %v118
    %v120 = vld [vmem:[#allocation8] sm:$0xff]
    %v121 = vld [vmem:[#allocation8 + $0x8] sm:$0xff]
    %v122 = vld [vmem:[#allocation8 + $0x10] sm:$0xff]
    %v123 = vld [vmem:[#allocation8 + $0x18] sm:$0xff]
    %v124 = vld [vmem:[#allocation5] sm:$0xff]
    %v125 = vld [vmem:[#allocation7] sm:$0xff]
    %v126 = vld [vmem:[%s3] sm:$0x1]
    %v128 = vlaneseq
    %v129 = vshrl.u32 %v128, 7
    %v130 = vsub.s32 0, %v129
    %v131 = vrot.slane %v126, %v130
    %vm133 = vcmask 64512
    %v135 = vsel %vm133, %v124, 0
    %137 = vmatprep.subr.mxu0 0.0
    %138 = vmatpush1.msra.mxu0 0.0
    %139 = vmatprep.subr.mxu0 0.0
    %140 = vmatpush1.msra.mxu0 0.0
    %141 = vmatprep.subr.mxu0 0.0
    %142 = vmatpush1.msra.mxu0 0.0
    %143 = vmatprep.subr.mxu0 0.0
    %144 = vmatpush1.msra.mxu0 0.0
    %145 = vmatprep.subr.mxu0 0.0
    %146 = vmatpush1.msra.mxu0 0.0
    %147 = vmatprep.subr.mxu0 0.0
    %148 = vmatpush1.msra.mxu0 0.0
    %149 = vmatprep.subr.mxu0 0.0
    %150 = vmatpush1.msra.mxu0 0.0
    %151 = vmatprep.subr.mxu0 0.0
    %152 = vmatpush1.msra.mxu0 0.0
    %153 = vmatprep.subr.mxu0 0.0
    %154 = vmatpush1.msra.mxu0 0.0
    %155 = vmatprep.subr.mxu0 0.0
    %156 = vmatpush1.msra.mxu0 0.0
    %157 = vmatprep.subr.mxu0 0.0
    %158 = vmatpush1.msra.mxu0 0.0
    %159 = vmatprep.subr.mxu0 0.0
    %160 = vmatpush1.msra.mxu0 0.0
    %161 = vmatprep.subr.mxu0 0.0
    %162 = vmatpush1.msra.mxu0 0.0
    %163 = vmatprep.subr.mxu0 0.0
    %164 = vmatpush1.msra.mxu0 0.0
    %165 = vmatprep.subr.mxu0 0.0
    %166 = vmatpush1.msra.mxu0 0.0
    %167 = vmatprep.subr.mxu0 0.0
    %168 = vmatpush1.msra.mxu0 %v125
    %169 = vmatprep.subr.mxu0 0.0
    %170 = vmatpush2.msra.mxu0 0.0
    %171 = vmatprep.subr.mxu0 0.0
    %172 = vmatpush2.msra.mxu0 0.0
    %173 = vmatprep.subr.mxu0 0.0
    %174 = vmatpush2.msra.mxu0 0.0
    %175 = vmatprep.subr.mxu0 0.0
    %176 = vmatpush2.msra.mxu0 0.0
    %177 = vmatprep.subr.mxu0 0.0
    %178 = vmatpush2.msra.mxu0 0.0
    %179 = vmatprep.subr.mxu0 0.0
    %180 = vmatpush2.msra.mxu0 0.0
    %181 = vmatprep.subr.mxu0 0.0
    %182 = vmatpush2.msra.mxu0 0.0
    %183 = vmatprep.subr.mxu0 0.0
    %184 = vmatpush2.msra.mxu0 0.0
    %185 = vmatprep.subr.mxu0 0.0
    %186 = vmatpush2.msra.mxu0 0.0
    %187 = vmatprep.subr.mxu0 0.0
    %188 = vmatpush2.msra.mxu0 0.0
    %189 = vmatprep.subr.mxu0 0.0
    %190 = vmatpush2.msra.mxu0 0.0
    %191 = vmatprep.subr.mxu0 0.0
    %192 = vmatpush2.msra.mxu0 0.0
    %193 = vmatprep.subr.mxu0 0.0
    %194 = vmatpush2.msra.mxu0 0.0
    %195 = vmatprep.subr.mxu0 0.0
    %196 = vmatpush2.msra.mxu0 0.0
    %197 = vmatprep.subr.mxu0 0.0
    %198 = vmatpush2.msra.mxu0 0.0
    %199 = vmatprep.subr.mxu0 0.0
    %200 = vmatpush2.msra.mxu0 0.0
    %201 = vmatprep.mubr.f32.mxu0 0.0
    %202 = vmatmul.mubr.f32.gmra.mxu0 %v135
    %v203 = vpop.f32.mrf.mxu0
    %v204 = vadd.f32 %v131, %v203
    %v205 = vpop.f32.mrf.mxu0
    %206 = vdwg.mxu0
    %v207 = vmul.f32 %v204, %v204
    %208 = vadd.xlane.f32.xlu0 %v207
    %v209 = vpop.xlane.xlu0 %208
    %v210 = vmul.f32 %v209, 0.03125
    %v211 = vadd.f32 %v210, 1e-08
    %v212 = vrsqrt.pop %v211
    %v213 = vmul.f32 %v204, %v212
    %v214 = vld [vmem:[#allocation10] sm:$0xff]
    %v215 = vld [vmem:[#allocation10 + $0x8] sm:$0xff]
    %v216 = vld [vmem:[#allocation10 + $0x10] sm:$0xff]
    %v217 = vld [vmem:[#allocation10 + $0x18] sm:$0xff]
    %v218 = vld [vmem:[#allocation10 + $0x20] sm:$0xff]
    %v219 = vld [vmem:[#allocation10 + $0x28] sm:$0xff]
    %v220 = vld [vmem:[#allocation10 + $0x30] sm:$0xff]
    %v221 = vld [vmem:[#allocation10 + $0x38] sm:$0xff]
    %v222 = vld [vmem:[#allocation10 + $0x40] sm:$0xff]
    %v223 = vld [vmem:[#allocation10 + $0x48] sm:$0xff]
    %v224 = vld [vmem:[#allocation10 + $0x50] sm:$0xff]
    %v225 = vld [vmem:[#allocation10 + $0x58] sm:$0xff]
    %v226 = vld [vmem:[#allocation10 + $0x60] sm:$0xff]
    %v227 = vld [vmem:[#allocation10 + $0x68] sm:$0xff]
    %v228 = vld [vmem:[#allocation10 + $0x70] sm:$0xff]
    %v229 = vld [vmem:[#allocation10 + $0x78] sm:$0xff]
    %230 = vmatprep.subr.mxu0 0.0
    %231 = vmatpush1.msra.mxu0 %v229
    %232 = vmatprep.subr.mxu0 0.0
    %233 = vmatpush1.msra.mxu0 %v228
    %234 = vmatprep.subr.mxu0 0.0
    %235 = vmatpush1.msra.mxu0 %v227
    %236 = vmatprep.subr.mxu0 0.0
    %237 = vmatpush1.msra.mxu0 %v226
    %238 = vmatprep.subr.mxu0 0.0
    %239 = vmatpush1.msra.mxu0 %v225
    %240 = vmatprep.subr.mxu0 0.0
    %241 = vmatpush1.msra.mxu0 %v224
    %242 = vmatprep.subr.mxu0 0.0
    %243 = vmatpush1.msra.mxu0 %v223
    %244 = vmatprep.subr.mxu0 0.0
    %245 = vmatpush1.msra.mxu0 %v222
    %246 = vmatprep.subr.mxu0 0.0
    %247 = vmatpush1.msra.mxu0 %v221
    %248 = vmatprep.subr.mxu0 0.0
    %249 = vmatpush1.msra.mxu0 %v220
    %250 = vmatprep.subr.mxu0 0.0
    %251 = vmatpush1.msra.mxu0 %v219
    %252 = vmatprep.subr.mxu0 0.0
    %253 = vmatpush1.msra.mxu0 %v218
    %254 = vmatprep.subr.mxu0 0.0
    %255 = vmatpush1.msra.mxu0 %v217
    %256 = vmatprep.subr.mxu0 0.0
    %257 = vmatpush1.msra.mxu0 %v216
    %258 = vmatprep.subr.mxu0 0.0
    %259 = vmatpush1.msra.mxu0 %v215
    %260 = vmatprep.subr.mxu0 0.0
    %261 = vmatpush1.msra.mxu0 %v214
    %262 = vmatprep.subr.mxu0 0.0
    %263 = vmatpush2.msra.mxu0 0.0
    %264 = vmatprep.subr.mxu0 0.0
    %265 = vmatpush2.msra.mxu0 0.0
    %266 = vmatprep.subr.mxu0 0.0
    %267 = vmatpush2.msra.mxu0 0.0
    %268 = vmatprep.subr.mxu0 0.0
    %269 = vmatpush2.msra.mxu0 0.0
    %270 = vmatprep.subr.mxu0 0.0
    %271 = vmatpush2.msra.mxu0 0.0
    %272 = vmatprep.subr.mxu0 0.0
    %273 = vmatpush2.msra.mxu0 0.0
    %274 = vmatprep.subr.mxu0 0.0
    %275 = vmatpush2.msra.mxu0 0.0
    %276 = vmatprep.subr.mxu0 0.0
    %277 = vmatpush2.msra.mxu0 0.0
    %278 = vmatprep.subr.mxu0 0.0
    %279 = vmatpush2.msra.mxu0 0.0
    %280 = vmatprep.subr.mxu0 0.0
    %281 = vmatpush2.msra.mxu0 0.0
    %282 = vmatprep.subr.mxu0 0.0
    %283 = vmatpush2.msra.mxu0 0.0
    %284 = vmatprep.subr.mxu0 0.0
    %285 = vmatpush2.msra.mxu0 0.0
    %286 = vmatprep.subr.mxu0 0.0
    %287 = vmatpush2.msra.mxu0 0.0
    %288 = vmatprep.subr.mxu0 0.0
    %289 = vmatpush2.msra.mxu0 0.0
    %290 = vmatprep.subr.mxu0 0.0
    %291 = vmatpush2.msra.mxu0 0.0
    %292 = vmatprep.subr.mxu0 0.0
    %293 = vmatpush2.msra.mxu0 0.0
    %294 = vmatprep.mubr.f32.mxu0 0.0
    %295 = vmatmul.mubr.f32.gmra.mxu0 %v213
    %v296 = vpop.f32.mrf.mxu0
    %v297 = vadd.f32 0.0, %v296
    %v298 = vpop.f32.mrf.mxu0
    %299 = vdwg.mxu0
    %v301 = vsel %vm111, %v119, 0
    %303 = vmatprep.subr.mxu0 0.0
    %304 = vmatpush1.msra.mxu0 0.0
    %305 = vmatprep.subr.mxu0 0.0
    %306 = vmatpush1.msra.mxu0 0.0
    %307 = vmatprep.subr.mxu0 0.0
    %308 = vmatpush1.msra.mxu0 0.0
    %309 = vmatprep.subr.mxu0 0.0
    %310 = vmatpush1.msra.mxu0 0.0
    %311 = vmatprep.subr.mxu0 0.0
    %312 = vmatpush1.msra.mxu0 0.0
    %313 = vmatprep.subr.mxu0 0.0
    %314 = vmatpush1.msra.mxu0 0.0
    %315 = vmatprep.subr.mxu0 0.0
    %316 = vmatpush1.msra.mxu0 0.0
    %317 = vmatprep.subr.mxu0 0.0
    %318 = vmatpush1.msra.mxu0 0.0
    %319 = vmatprep.subr.mxu0 0.0
    %320 = vmatpush1.msra.mxu0 0.0
    %321 = vmatprep.subr.mxu0 0.0
    %322 = vmatpush1.msra.mxu0 0.0
    %323 = vmatprep.subr.mxu0 0.0
    %324 = vmatpush1.msra.mxu0 0.0
    %325 = vmatprep.subr.mxu0 0.0
    %326 = vmatpush1.msra.mxu0 0.0
    %327 = vmatprep.subr.mxu0 0.0
    %328 = vmatpush1.msra.mxu0 %v123
    %329 = vmatprep.subr.mxu0 0.0
    %330 = vmatpush1.msra.mxu0 %v122
    %331 = vmatprep.subr.mxu0 0.0
    %332 = vmatpush1.msra.mxu0 %v121
    %333 = vmatprep.subr.mxu0 0.0
    %334 = vmatpush1.msra.mxu0 %v120
    %335 = vmatprep.subr.mxu0 0.0
    %336 = vmatpush2.msra.mxu0 0.0
    %337 = vmatprep.subr.mxu0 0.0
    %338 = vmatpush2.msra.mxu0 0.0
    %339 = vmatprep.subr.mxu0 0.0
    %340 = vmatpush2.msra.mxu0 0.0
    %341 = vmatprep.subr.mxu0 0.0
    %342 = vmatpush2.msra.mxu0 0.0
    %343 = vmatprep.subr.mxu0 0.0
    %344 = vmatpush2.msra.mxu0 0.0
    %345 = vmatprep.subr.mxu0 0.0
    %346 = vmatpush2.msra.mxu0 0.0
    %347 = vmatprep.subr.mxu0 0.0
    %348 = vmatpush2.msra.mxu0 0.0
    %349 = vmatprep.subr.mxu0 0.0
    %350 = vmatpush2.msra.mxu0 0.0
    %351 = vmatprep.subr.mxu0 0.0
    %352 = vmatpush2.msra.mxu0 0.0
    %353 = vmatprep.subr.mxu0 0.0
    %354 = vmatpush2.msra.mxu0 0.0
    %355 = vmatprep.subr.mxu0 0.0
    %356 = vmatpush2.msra.mxu0 0.0
    %357 = vmatprep.subr.mxu0 0.0
    %358 = vmatpush2.msra.mxu0 0.0
    %359 = vmatprep.subr.mxu0 0.0
    %360 = vmatpush2.msra.mxu0 0.0
    %361 = vmatprep.subr.mxu0 0.0
    %362 = vmatpush2.msra.mxu0 0.0
    %363 = vmatprep.subr.mxu0 0.0
    %364 = vmatpush2.msra.mxu0 0.0
    %365 = vmatprep.subr.mxu0 0.0
    %366 = vmatpush2.msra.mxu0 0.0
    %367 = vmatprep.mubr.f32.mxu0 0.0
    %368 = vmatmul.mubr.f32.gmra.mxu0 %v301
    %v369 = vpop.f32.mrf.mxu0
    %v370 = vadd.f32 %v297, %v369
    %v371 = vpop.f32.mrf.mxu0
    %372 = vdwg.mxu0
    %v373 = vld [vmem:[%s6] sm:$0x1]
    %v375 = vlaneseq
    %v376 = vshrl.u32 %v375, 7
    %v377 = vsub.s32 0, %v376
    %v378 = vrot.slane %v373, %v377
    %v380 = vadd.f32 %v370, %v378
    %v381 = vmul.f32 %v380, 0.2
    %v382 = vmax.f32 %v380, %v381
    %v383 = vld [vmem:[#allocation11] sm:$0xff]
    %v384 = vld [vmem:[#allocation11 + $0x8] sm:$0xff]
    %v385 = vld [vmem:[#allocation11 + $0x10] sm:$0xff]
    %v386 = vld [vmem:[#allocation11 + $0x18] sm:$0xff]
    %v387 = vld [vmem:[#allocation11 + $0x20] sm:$0xff]
    %v388 = vld [vmem:[#allocation11 + $0x28] sm:$0xff]
    %v389 = vld [vmem:[#allocation11 + $0x30] sm:$0xff]
    %v390 = vld [vmem:[#allocation11 + $0x38] sm:$0xff]
    %v391 = vld [vmem:[#allocation11 + $0x40] sm:$0xff]
    %v392 = vld [vmem:[#allocation11 + $0x48] sm:$0xff]
    %v393 = vld [vmem:[#allocation11 + $0x50] sm:$0xff]
    %v394 = vld [vmem:[#allocation11 + $0x58] sm:$0xff]
    %v395 = vld [vmem:[#allocation11 + $0x60] sm:$0xff]
    %v396 = vld [vmem:[#allocation11 + $0x68] sm:$0xff]
    %v397 = vld [vmem:[#allocation11 + $0x70] sm:$0xff]
    %v398 = vld [vmem:[#allocation11 + $0x78] sm:$0xff]
    %v399 = vld [vmem:[%s8] sm:$0x1]
    %v401 = vlaneseq
    %v402 = vshrl.u32 %v401, 7
    %v403 = vsub.s32 0, %v402
    %v404 = vrot.slane %v399, %v403
    %406 = vmatprep.subr.mxu0 0.0
    %407 = vmatpush1.msra.mxu0 %v398
    %408 = vmatprep.subr.mxu0 0.0
    %409 = vmatpush1.msra.mxu0 %v397
    %410 = vmatprep.subr.mxu0 0.0
    %411 = vmatpush1.msra.mxu0 %v396
    %412 = vmatprep.subr.mxu0 0.0
    %413 = vmatpush1.msra.mxu0 %v395
    %414 = vmatprep.subr.mxu0 0.0
    %415 = vmatpush1.msra.mxu0 %v394
    %416 = vmatprep.subr.mxu0 0.0
    %417 = vmatpush1.msra.mxu0 %v393
    %418 = vmatprep.subr.mxu0 0.0
    %419 = vmatpush1.msra.mxu0 %v392
    %420 = vmatprep.subr.mxu0 0.0
    %421 = vmatpush1.msra.mxu0 %v391
    %422 = vmatprep.subr.mxu0 0.0
    %423 = vmatpush1.msra.mxu0 %v390
    %424 = vmatprep.subr.mxu0 0.0
    %425 = vmatpush1.msra.mxu0 %v389
    %426 = vmatprep.subr.mxu0 0.0
    %427 = vmatpush1.msra.mxu0 %v388
    %428 = vmatprep.subr.mxu0 0.0
    %429 = vmatpush1.msra.mxu0 %v387
    %430 = vmatprep.subr.mxu0 0.0
    %431 = vmatpush1.msra.mxu0 %v386
    %432 = vmatprep.subr.mxu0 0.0
    %433 = vmatpush1.msra.mxu0 %v385
    %434 = vmatprep.subr.mxu0 0.0
    %435 = vmatpush1.msra.mxu0 %v384
    %436 = vmatprep.subr.mxu0 0.0
    %437 = vmatpush1.msra.mxu0 %v383
    %438 = vmatprep.subr.mxu0 0.0
    %439 = vmatpush2.msra.mxu0 0.0
    %440 = vmatprep.subr.mxu0 0.0
    %441 = vmatpush2.msra.mxu0 0.0
    %442 = vmatprep.subr.mxu0 0.0
    %443 = vmatpush2.msra.mxu0 0.0
    %444 = vmatprep.subr.mxu0 0.0
    %445 = vmatpush2.msra.mxu0 0.0
    %446 = vmatprep.subr.mxu0 0.0
    %447 = vmatpush2.msra.mxu0 0.0
    %448 = vmatprep.subr.mxu0 0.0
    %449 = vmatpush2.msra.mxu0 0.0
    %450 = vmatprep.subr.mxu0 0.0
    %451 = vmatpush2.msra.mxu0 0.0
    %452 = vmatprep.subr.mxu0 0.0
    %453 = vmatpush2.msra.mxu0 0.0
    %454 = vmatprep.subr.mxu0 0.0
    %455 = vmatpush2.msra.mxu0 0.0
    %456 = vmatprep.subr.mxu0 0.0
    %457 = vmatpush2.msra.mxu0 0.0
    %458 = vmatprep.subr.mxu0 0.0
    %459 = vmatpush2.msra.mxu0 0.0
    %460 = vmatprep.subr.mxu0 0.0
    %461 = vmatpush2.msra.mxu0 0.0
    %462 = vmatprep.subr.mxu0 0.0
    %463 = vmatpush2.msra.mxu0 0.0
    %464 = vmatprep.subr.mxu0 0.0
    %465 = vmatpush2.msra.mxu0 0.0
    %466 = vmatprep.subr.mxu0 0.0
    %467 = vmatpush2.msra.mxu0 0.0
    %468 = vmatprep.subr.mxu0 0.0
    %469 = vmatpush2.msra.mxu0 0.0
    %470 = vmatprep.mubr.f32.mxu0 0.0
    %471 = vmatmul.mubr.f32.gmra.mxu0 %v382
    %v472 = vpop.f32.mrf.mxu0
    %v473 = vadd.f32 %v404, %v472
    %v474 = vpop.f32.mrf.mxu0
    %475 = vdwg.mxu0
    %v476 = vmul.f32 %v473, 0.2
    %v477 = vmax.f32 %v473, %v476
    %s478 = scalar_lea.vmem [#allocation11], 128
    %v479 = vld [vmem:[%s478] sm:$0xff]
    %v480 = vld [vmem:[%s478 + $0x8] sm:$0xff]
    %v481 = vld [vmem:[%s478 + $0x10] sm:$0xff]
    %v482 = vld [vmem:[%s478 + $0x18] sm:$0xff]
    %v483 = vld [vmem:[%s478 + $0x20] sm:$0xff]
    %v484 = vld [vmem:[%s478 + $0x28] sm:$0xff]
    %v485 = vld [vmem:[%s478 + $0x30] sm:$0xff]
    %v486 = vld [vmem:[%s478 + $0x38] sm:$0xff]
    %v487 = vld [vmem:[%s478 + $0x40] sm:$0xff]
    %v488 = vld [vmem:[%s478 + $0x48] sm:$0xff]
    %v489 = vld [vmem:[%s478 + $0x50] sm:$0xff]
    %v490 = vld [vmem:[%s478 + $0x58] sm:$0xff]
    %v491 = vld [vmem:[%s478 + $0x60] sm:$0xff]
    %v492 = vld [vmem:[%s478 + $0x68] sm:$0xff]
    %v493 = vld [vmem:[%s478 + $0x70] sm:$0xff]
    %v494 = vld [vmem:[%s478 + $0x78] sm:$0xff]
    %s495 = scalar_lea.vmem %s8, 1
    %v496 = vld [vmem:[%s495] sm:$0x1]
    %v498 = vlaneseq
    %v499 = vshrl.u32 %v498, 7
    %v500 = vsub.s32 0, %v499
    %v501 = vrot.slane %v496, %v500
    %503 = vmatprep.subr.mxu0 0.0
    %504 = vmatpush1.msra.mxu0 %v494
    %505 = vmatprep.subr.mxu0 0.0
    %506 = vmatpush1.msra.mxu0 %v493
    %507 = vmatprep.subr.mxu0 0.0
    %508 = vmatpush1.msra.mxu0 %v492
    %509 = vmatprep.subr.mxu0 0.0
    %510 = vmatpush1.msra.mxu0 %v491
    %511 = vmatprep.subr.mxu0 0.0
    %512 = vmatpush1.msra.mxu0 %v490
    %513 = vmatprep.subr.mxu0 0.0
    %514 = vmatpush1.msra.mxu0 %v489
    %515 = vmatprep.subr.mxu0 0.0
    %516 = vmatpush1.msra.mxu0 %v488
    %517 = vmatprep.subr.mxu0 0.0
    %518 = vmatpush1.msra.mxu0 %v487
    %519 = vmatprep.subr.mxu0 0.0
    %520 = vmatpush1.msra.mxu0 %v486
    %521 = vmatprep.subr.mxu0 0.0
    %522 = vmatpush1.msra.mxu0 %v485
    %523 = vmatprep.subr.mxu0 0.0
    %524 = vmatpush1.msra.mxu0 %v484
    %525 = vmatprep.subr.mxu0 0.0
    %526 = vmatpush1.msra.mxu0 %v483
    %527 = vmatprep.subr.mxu0 0.0
    %528 = vmatpush1.msra.mxu0 %v482
    %529 = vmatprep.subr.mxu0 0.0
    %530 = vmatpush1.msra.mxu0 %v481
    %531 = vmatprep.subr.mxu0 0.0
    %532 = vmatpush1.msra.mxu0 %v480
    %533 = vmatprep.subr.mxu0 0.0
    %534 = vmatpush1.msra.mxu0 %v479
    %535 = vmatprep.subr.mxu0 0.0
    %536 = vmatpush2.msra.mxu0 0.0
    %537 = vmatprep.subr.mxu0 0.0
    %538 = vmatpush2.msra.mxu0 0.0
    %539 = vmatprep.subr.mxu0 0.0
    %540 = vmatpush2.msra.mxu0 0.0
    %541 = vmatprep.subr.mxu0 0.0
    %542 = vmatpush2.msra.mxu0 0.0
    %543 = vmatprep.subr.mxu0 0.0
    %544 = vmatpush2.msra.mxu0 0.0
    %545 = vmatprep.subr.mxu0 0.0
    %546 = vmatpush2.msra.mxu0 0.0
    %547 = vmatprep.subr.mxu0 0.0
    %548 = vmatpush2.msra.mxu0 0.0
    %549 = vmatprep.subr.mxu0 0.0
    %550 = vmatpush2.msra.mxu0 0.0
    %551 = vmatprep.subr.mxu0 0.0
    %552 = vmatpush2.msra.mxu0 0.0
    %553 = vmatprep.subr.mxu0 0.0
    %554 = vmatpush2.msra.mxu0 0.0
    %555 = vmatprep.subr.mxu0 0.0
    %556 = vmatpush2.msra.mxu0 0.0
    %557 = vmatprep.subr.mxu0 0.0
    %558 = vmatpush2.msra.mxu0 0.0
    %559 = vmatprep.subr.mxu0 0.0
    %560 = vmatpush2.msra.mxu0 0.0
    %561 = vmatprep.subr.mxu0 0.0
    %562 = vmatpush2.msra.mxu0 0.0
    %563 = vmatprep.subr.mxu0 0.0
    %564 = vmatpush2.msra.mxu0 0.0
    %565 = vmatprep.subr.mxu0 0.0
    %566 = vmatpush2.msra.mxu0 0.0
    %567 = vmatprep.mubr.f32.mxu0 0.0
    %568 = vmatmul.mubr.f32.gmra.mxu0 %v477
    %v569 = vpop.f32.mrf.mxu0
    %v570 = vadd.f32 %v501, %v569
    %v571 = vpop.f32.mrf.mxu0
    %572 = vdwg.mxu0
    %v573 = vmul.f32 %v570, 0.2
    %v574 = vmax.f32 %v570, %v573
    %s575 = scalar_lea.vmem [#allocation11], 256
    %v576 = vld [vmem:[%s575] sm:$0xff]
    %v577 = vld [vmem:[%s575 + $0x8] sm:$0xff]
    %v578 = vld [vmem:[%s575 + $0x10] sm:$0xff]
    %v579 = vld [vmem:[%s575 + $0x18] sm:$0xff]
    %v580 = vld [vmem:[%s575 + $0x20] sm:$0xff]
    %v581 = vld [vmem:[%s575 + $0x28] sm:$0xff]
    %v582 = vld [vmem:[%s575 + $0x30] sm:$0xff]
    %v583 = vld [vmem:[%s575 + $0x38] sm:$0xff]
    %v584 = vld [vmem:[%s575 + $0x40] sm:$0xff]
    %v585 = vld [vmem:[%s575 + $0x48] sm:$0xff]
    %v586 = vld [vmem:[%s575 + $0x50] sm:$0xff]
    %v587 = vld [vmem:[%s575 + $0x58] sm:$0xff]
    %v588 = vld [vmem:[%s575 + $0x60] sm:$0xff]
    %v589 = vld [vmem:[%s575 + $0x68] sm:$0xff]
    %v590 = vld [vmem:[%s575 + $0x70] sm:$0xff]
    %v591 = vld [vmem:[%s575 + $0x78] sm:$0xff]
    %s592 = scalar_lea.vmem %s8, 2
    %v593 = vld [vmem:[%s592] sm:$0x1]
    %v595 = vlaneseq
    %v596 = vshrl.u32 %v595, 7
    %v597 = vsub.s32 0, %v596
    %v598 = vrot.slane %v593, %v597
    %600 = vmatprep.subr.mxu0 0.0
    %601 = vmatpush1.msra.mxu0 %v591
    %602 = vmatprep.subr.mxu0 0.0
    %603 = vmatpush1.msra.mxu0 %v590
    %604 = vmatprep.subr.mxu0 0.0
    %605 = vmatpush1.msra.mxu0 %v589
    %606 = vmatprep.subr.mxu0 0.0
    %607 = vmatpush1.msra.mxu0 %v588
    %608 = vmatprep.subr.mxu0 0.0
    %609 = vmatpush1.msra.mxu0 %v587
    %610 = vmatprep.subr.mxu0 0.0
    %611 = vmatpush1.msra.mxu0 %v586
    %612 = vmatprep.subr.mxu0 0.0
    %613 = vmatpush1.msra.mxu0 %v585
    %614 = vmatprep.subr.mxu0 0.0
    %615 = vmatpush1.msra.mxu0 %v584
    %616 = vmatprep.subr.mxu0 0.0
    %617 = vmatpush1.msra.mxu0 %v583
    %618 = vmatprep.subr.mxu0 0.0
    %619 = vmatpush1.msra.mxu0 %v582
    %620 = vmatprep.subr.mxu0 0.0
    %621 = vmatpush1.msra.mxu0 %v581
    %622 = vmatprep.subr.mxu0 0.0
    %623 = vmatpush1.msra.mxu0 %v580
    %624 = vmatprep.subr.mxu0 0.0
    %625 = vmatpush1.msra.mxu0 %v579
    %626 = vmatprep.subr.mxu0 0.0
    %627 = vmatpush1.msra.mxu0 %v578
    %628 = vmatprep.subr.mxu0 0.0
    %629 = vmatpush1.msra.mxu0 %v577
    %630 = vmatprep.subr.mxu0 0.0
    %631 = vmatpush1.msra.mxu0 %v576
    %632 = vmatprep.subr.mxu0 0.0
    %633 = vmatpush2.msra.mxu0 0.0
    %634 = vmatprep.subr.mxu0 0.0
    %635 = vmatpush2.msra.mxu0 0.0
    %636 = vmatprep.subr.mxu0 0.0
    %637 = vmatpush2.msra.mxu0 0.0
    %638 = vmatprep.subr.mxu0 0.0
    %639 = vmatpush2.msra.mxu0 0.0
    %640 = vmatprep.subr.mxu0 0.0
    %641 = vmatpush2.msra.mxu0 0.0
    %642 = vmatprep.subr.mxu0 0.0
    %643 = vmatpush2.msra.mxu0 0.0
    %644 = vmatprep.subr.mxu0 0.0
    %645 = vmatpush2.msra.mxu0 0.0
    %646 = vmatprep.subr.mxu0 0.0
    %647 = vmatpush2.msra.mxu0 0.0
    %648 = vmatprep.subr.mxu0 0.0
    %649 = vmatpush2.msra.mxu0 0.0
    %650 = vmatprep.subr.mxu0 0.0
    %651 = vmatpush2.msra.mxu0 0.0
    %652 = vmatprep.subr.mxu0 0.0
    %653 = vmatpush2.msra.mxu0 0.0
    %654 = vmatprep.subr.mxu0 0.0
    %655 = vmatpush2.msra.mxu0 0.0
    %656 = vmatprep.subr.mxu0 0.0
    %657 = vmatpush2.msra.mxu0 0.0
    %658 = vmatprep.subr.mxu0 0.0
    %659 = vmatpush2.msra.mxu0 0.0
    %660 = vmatprep.subr.mxu0 0.0
    %661 = vmatpush2.msra.mxu0 0.0
    %662 = vmatprep.subr.mxu0 0.0
    %663 = vmatpush2.msra.mxu0 0.0
    %664 = vmatprep.mubr.f32.mxu0 0.0
    %665 = vmatmul.mubr.f32.gmra.mxu0 %v574
    %v666 = vpop.f32.mrf.mxu0
    %v667 = vadd.f32 %v598, %v666
    %v668 = vpop.f32.mrf.mxu0
    %669 = vdwg.mxu0
    %v670 = vmul.f32 %v667, 0.2
    %v671 = vmax.f32 %v667, %v670
    %s672 = scalar_lea.vmem [#allocation11], 384
    %v673 = vld [vmem:[%s672] sm:$0xff]
    %v674 = vld [vmem:[%s672 + $0x8] sm:$0xff]
    %v675 = vld [vmem:[%s672 + $0x10] sm:$0xff]
    %v676 = vld [vmem:[%s672 + $0x18] sm:$0xff]
    %v677 = vld [vmem:[%s672 + $0x20] sm:$0xff]
    %v678 = vld [vmem:[%s672 + $0x28] sm:$0xff]
    %v679 = vld [vmem:[%s672 + $0x30] sm:$0xff]
    %v680 = vld [vmem:[%s672 + $0x38] sm:$0xff]
    %v681 = vld [vmem:[%s672 + $0x40] sm:$0xff]
    %v682 = vld [vmem:[%s672 + $0x48] sm:$0xff]
    %v683 = vld [vmem:[%s672 + $0x50] sm:$0xff]
    %v684 = vld [vmem:[%s672 + $0x58] sm:$0xff]
    %v685 = vld [vmem:[%s672 + $0x60] sm:$0xff]
    %v686 = vld [vmem:[%s672 + $0x68] sm:$0xff]
    %v687 = vld [vmem:[%s672 + $0x70] sm:$0xff]
    %v688 = vld [vmem:[%s672 + $0x78] sm:$0xff]
    %s689 = scalar_lea.vmem %s8, 3
    %v690 = vld [vmem:[%s689] sm:$0x1]
    %v692 = vlaneseq
    %v693 = vshrl.u32 %v692, 7
    %v694 = vsub.s32 0, %v693
    %v695 = vrot.slane %v690, %v694
    %697 = vmatprep.subr.mxu0 0.0
    %698 = vmatpush1.msra.mxu0 %v688
    %699 = vmatprep.subr.mxu0 0.0
    %700 = vmatpush1.msra.mxu0 %v687
    %701 = vmatprep.subr.mxu0 0.0
    %702 = vmatpush1.msra.mxu0 %v686
    %703 = vmatprep.subr.mxu0 0.0
    %704 = vmatpush1.msra.mxu0 %v685
    %705 = vmatprep.subr.mxu0 0.0
    %706 = vmatpush1.msra.mxu0 %v684
    %707 = vmatprep.subr.mxu0 0.0
    %708 = vmatpush1.msra.mxu0 %v683
    %709 = vmatprep.subr.mxu0 0.0
    %710 = vmatpush1.msra.mxu0 %v682
    %711 = vmatprep.subr.mxu0 0.0
    %712 = vmatpush1.msra.mxu0 %v681
    %713 = vmatprep.subr.mxu0 0.0
    %714 = vmatpush1.msra.mxu0 %v680
    %715 = vmatprep.subr.mxu0 0.0
    %716 = vmatpush1.msra.mxu0 %v679
    %717 = vmatprep.subr.mxu0 0.0
    %718 = vmatpush1.msra.mxu0 %v678
    %719 = vmatprep.subr.mxu0 0.0
    %720 = vmatpush1.msra.mxu0 %v677
    %721 = vmatprep.subr.mxu0 0.0
    %722 = vmatpush1.msra.mxu0 %v676
    %723 = vmatprep.subr.mxu0 0.0
    %724 = vmatpush1.msra.mxu0 %v675
    %725 = vmatprep.subr.mxu0 0.0
    %726 = vmatpush1.msra.mxu0 %v674
    %727 = vmatprep.subr.mxu0 0.0
    %728 = vmatpush1.msra.mxu0 %v673
    %729 = vmatprep.subr.mxu0 0.0
    %730 = vmatpush2.msra.mxu0 0.0
    %731 = vmatprep.subr.mxu0 0.0
    %732 = vmatpush2.msra.mxu0 0.0
    %733 = vmatprep.subr.mxu0 0.0
    %734 = vmatpush2.msra.mxu0 0.0
    %735 = vmatprep.subr.mxu0 0.0
    %736 = vmatpush2.msra.mxu0 0.0
    %737 = vmatprep.subr.mxu0 0.0
    %738 = vmatpush2.msra.mxu0 0.0
    %739 = vmatprep.subr.mxu0 0.0
    %740 = vmatpush2.msra.mxu0 0.0
    %741 = vmatprep.subr.mxu0 0.0
    %742 = vmatpush2.msra.mxu0 0.0
    %743 = vmatprep.subr.mxu0 0.0
    %744 = vmatpush2.msra.mxu0 0.0
    %745 = vmatprep.subr.mxu0 0.0
    %746 = vmatpush2.msra.mxu0 0.0
    %747 = vmatprep.subr.mxu0 0.0
    %748 = vmatpush2.msra.mxu0 0.0
    %749 = vmatprep.subr.mxu0 0.0
    %750 = vmatpush2.msra.mxu0 0.0
    %751 = vmatprep.subr.mxu0 0.0
    %752 = vmatpush2.msra.mxu0 0.0
    %753 = vmatprep.subr.mxu0 0.0
    %754 = vmatpush2.msra.mxu0 0.0
    %755 = vmatprep.subr.mxu0 0.0
    %756 = vmatpush2.msra.mxu0 0.0
    %757 = vmatprep.subr.mxu0 0.0
    %758 = vmatpush2.msra.mxu0 0.0
    %759 = vmatprep.subr.mxu0 0.0
    %760 = vmatpush2.msra.mxu0 0.0
    %761 = vmatprep.mubr.f32.mxu0 0.0
    %762 = vmatmul.mubr.f32.gmra.mxu0 %v671
    %v763 = vpop.f32.mrf.mxu0
    %v764 = vadd.f32 %v695, %v763
    %v765 = vpop.f32.mrf.mxu0
    %766 = vdwg.mxu0
    %v767 = vmul.f32 %v764, 0.2
    %v768 = vmax.f32 %v764, %v767
    %s769 = scalar_lea.vmem [#allocation11], 512
    %v770 = vld [vmem:[%s769] sm:$0xff]
    %v771 = vld [vmem:[%s769 + $0x8] sm:$0xff]
    %v772 = vld [vmem:[%s769 + $0x10] sm:$0xff]
    %v773 = vld [vmem:[%s769 + $0x18] sm:$0xff]
    %v774 = vld [vmem:[%s769 + $0x20] sm:$0xff]
    %v775 = vld [vmem:[%s769 + $0x28] sm:$0xff]
    %v776 = vld [vmem:[%s769 + $0x30] sm:$0xff]
    %v777 = vld [vmem:[%s769 + $0x38] sm:$0xff]
    %v778 = vld [vmem:[%s769 + $0x40] sm:$0xff]
    %v779 = vld [vmem:[%s769 + $0x48] sm:$0xff]
    %v780 = vld [vmem:[%s769 + $0x50] sm:$0xff]
    %v781 = vld [vmem:[%s769 + $0x58] sm:$0xff]
    %v782 = vld [vmem:[%s769 + $0x60] sm:$0xff]
    %v783 = vld [vmem:[%s769 + $0x68] sm:$0xff]
    %v784 = vld [vmem:[%s769 + $0x70] sm:$0xff]
    %v785 = vld [vmem:[%s769 + $0x78] sm:$0xff]
    %s786 = scalar_lea.vmem %s8, 4
    %v787 = vld [vmem:[%s786] sm:$0x1]
    %v789 = vlaneseq
    %v790 = vshrl.u32 %v789, 7
    %v791 = vsub.s32 0, %v790
    %v792 = vrot.slane %v787, %v791
    %794 = vmatprep.subr.mxu0 0.0
    %795 = vmatpush1.msra.mxu0 %v785
    %796 = vmatprep.subr.mxu0 0.0
    %797 = vmatpush1.msra.mxu0 %v784
    %798 = vmatprep.subr.mxu0 0.0
    %799 = vmatpush1.msra.mxu0 %v783
    %800 = vmatprep.subr.mxu0 0.0
    %801 = vmatpush1.msra.mxu0 %v782
    %802 = vmatprep.subr.mxu0 0.0
    %803 = vmatpush1.msra.mxu0 %v781
    %804 = vmatprep.subr.mxu0 0.0
    %805 = vmatpush1.msra.mxu0 %v780
    %806 = vmatprep.subr.mxu0 0.0
    %807 = vmatpush1.msra.mxu0 %v779
    %808 = vmatprep.subr.mxu0 0.0
    %809 = vmatpush1.msra.mxu0 %v778
    %810 = vmatprep.subr.mxu0 0.0
    %811 = vmatpush1.msra.mxu0 %v777
    %812 = vmatprep.subr.mxu0 0.0
    %813 = vmatpush1.msra.mxu0 %v776
    %814 = vmatprep.subr.mxu0 0.0
    %815 = vmatpush1.msra.mxu0 %v775
    %816 = vmatprep.subr.mxu0 0.0
    %817 = vmatpush1.msra.mxu0 %v774
    %818 = vmatprep.subr.mxu0 0.0
    %819 = vmatpush1.msra.mxu0 %v773
    %820 = vmatprep.subr.mxu0 0.0
    %821 = vmatpush1.msra.mxu0 %v772
    %822 = vmatprep.subr.mxu0 0.0
    %823 = vmatpush1.msra.mxu0 %v771
    %824 = vmatprep.subr.mxu0 0.0
    %825 = vmatpush1.msra.mxu0 %v770
    %826 = vmatprep.subr.mxu0 0.0
    %827 = vmatpush2.msra.mxu0 0.0
    %828 = vmatprep.subr.mxu0 0.0
    %829 = vmatpush2.msra.mxu0 0.0
    %830 = vmatprep.subr.mxu0 0.0
    %831 = vmatpush2.msra.mxu0 0.0
    %832 = vmatprep.subr.mxu0 0.0
    %833 = vmatpush2.msra.mxu0 0.0
    %834 = vmatprep.subr.mxu0 0.0
    %835 = vmatpush2.msra.mxu0 0.0
    %836 = vmatprep.subr.mxu0 0.0
    %837 = vmatpush2.msra.mxu0 0.0
    %838 = vmatprep.subr.mxu0 0.0
    %839 = vmatpush2.msra.mxu0 0.0
    %840 = vmatprep.subr.mxu0 0.0
    %841 = vmatpush2.msra.mxu0 0.0
    %842 = vmatprep.subr.mxu0 0.0
    %843 = vmatpush2.msra.mxu0 0.0
    %844 = vmatprep.subr.mxu0 0.0
    %845 = vmatpush2.msra.mxu0 0.0
    %846 = vmatprep.subr.mxu0 0.0
    %847 = vmatpush2.msra.mxu0 0.0
    %848 = vmatprep.subr.mxu0 0.0
    %849 = vmatpush2.msra.mxu0 0.0
    %850 = vmatprep.subr.mxu0 0.0
    %851 = vmatpush2.msra.mxu0 0.0
    %852 = vmatprep.subr.mxu0 0.0
    %853 = vmatpush2.msra.mxu0 0.0
    %854 = vmatprep.subr.mxu0 0.0
    %855 = vmatpush2.msra.mxu0 0.0
    %856 = vmatprep.subr.mxu0 0.0
    %857 = vmatpush2.msra.mxu0 0.0
    %858 = vmatprep.mubr.f32.mxu0 0.0
    %859 = vmatmul.mubr.f32.gmra.mxu0 %v768
    %v860 = vpop.f32.mrf.mxu0
    %v861 = vadd.f32 %v792, %v860
    %v862 = vpop.f32.mrf.mxu0
    %863 = vdwg.mxu0
    %v864 = vmul.f32 %v861, 0.2
    %v865 = vmax.f32 %v861, %v864
    %s866 = scalar_lea.vmem [#allocation11], 640
    %v867 = vld [vmem:[%s866] sm:$0xff]
    %v868 = vld [vmem:[%s866 + $0x8] sm:$0xff]
    %v869 = vld [vmem:[%s866 + $0x10] sm:$0xff]
    %v870 = vld [vmem:[%s866 + $0x18] sm:$0xff]
    %v871 = vld [vmem:[%s866 + $0x20] sm:$0xff]
    %v872 = vld [vmem:[%s866 + $0x28] sm:$0xff]
    %v873 = vld [vmem:[%s866 + $0x30] sm:$0xff]
    %v874 = vld [vmem:[%s866 + $0x38] sm:$0xff]
    %v875 = vld [vmem:[%s866 + $0x40] sm:$0xff]
    %v876 = vld [vmem:[%s866 + $0x48] sm:$0xff]
    %v877 = vld [vmem:[%s866 + $0x50] sm:$0xff]
    %v878 = vld [vmem:[%s866 + $0x58] sm:$0xff]
    %v879 = vld [vmem:[%s866 + $0x60] sm:$0xff]
    %v880 = vld [vmem:[%s866 + $0x68] sm:$0xff]
    %v881 = vld [vmem:[%s866 + $0x70] sm:$0xff]
    %v882 = vld [vmem:[%s866 + $0x78] sm:$0xff]
    %s883 = scalar_lea.vmem %s8, 5
    %v884 = vld [vmem:[%s883] sm:$0x1]
    %v886 = vlaneseq
    %v887 = vshrl.u32 %v886, 7
    %v888 = vsub.s32 0, %v887
    %v889 = vrot.slane %v884, %v888
    %891 = vmatprep.subr.mxu0 0.0
    %892 = vmatpush1.msra.mxu0 %v882
    %893 = vmatprep.subr.mxu0 0.0
    %894 = vmatpush1.msra.mxu0 %v881
    %895 = vmatprep.subr.mxu0 0.0
    %896 = vmatpush1.msra.mxu0 %v880
    %897 = vmatprep.subr.mxu0 0.0
    %898 = vmatpush1.msra.mxu0 %v879
    %899 = vmatprep.subr.mxu0 0.0
    %900 = vmatpush1.msra.mxu0 %v878
    %901 = vmatprep.subr.mxu0 0.0
    %902 = vmatpush1.msra.mxu0 %v877
    %903 = vmatprep.subr.mxu0 0.0
    %904 = vmatpush1.msra.mxu0 %v876
    %905 = vmatprep.subr.mxu0 0.0
    %906 = vmatpush1.msra.mxu0 %v875
    %907 = vmatprep.subr.mxu0 0.0
    %908 = vmatpush1.msra.mxu0 %v874
    %909 = vmatprep.subr.mxu0 0.0
    %910 = vmatpush1.msra.mxu0 %v873
    %911 = vmatprep.subr.mxu0 0.0
    %912 = vmatpush1.msra.mxu0 %v872
    %913 = vmatprep.subr.mxu0 0.0
    %914 = vmatpush1.msra.mxu0 %v871
    %915 = vmatprep.subr.mxu0 0.0
    %916 = vmatpush1.msra.mxu0 %v870
    %917 = vmatprep.subr.mxu0 0.0
    %918 = vmatpush1.msra.mxu0 %v869
    %919 = vmatprep.subr.mxu0 0.0
    %920 = vmatpush1.msra.mxu0 %v868
    %921 = vmatprep.subr.mxu0 0.0
    %922 = vmatpush1.msra.mxu0 %v867
    %923 = vmatprep.subr.mxu0 0.0
    %924 = vmatpush2.msra.mxu0 0.0
    %925 = vmatprep.subr.mxu0 0.0
    %926 = vmatpush2.msra.mxu0 0.0
    %927 = vmatprep.subr.mxu0 0.0
    %928 = vmatpush2.msra.mxu0 0.0
    %929 = vmatprep.subr.mxu0 0.0
    %930 = vmatpush2.msra.mxu0 0.0
    %931 = vmatprep.subr.mxu0 0.0
    %932 = vmatpush2.msra.mxu0 0.0
    %933 = vmatprep.subr.mxu0 0.0
    %934 = vmatpush2.msra.mxu0 0.0
    %935 = vmatprep.subr.mxu0 0.0
    %936 = vmatpush2.msra.mxu0 0.0
    %937 = vmatprep.subr.mxu0 0.0
    %938 = vmatpush2.msra.mxu0 0.0
    %939 = vmatprep.subr.mxu0 0.0
    %940 = vmatpush2.msra.mxu0 0.0
    %941 = vmatprep.subr.mxu0 0.0
    %942 = vmatpush2.msra.mxu0 0.0
    %943 = vmatprep.subr.mxu0 0.0
    %944 = vmatpush2.msra.mxu0 0.0
    %945 = vmatprep.subr.mxu0 0.0
    %946 = vmatpush2.msra.mxu0 0.0
    %947 = vmatprep.subr.mxu0 0.0
    %948 = vmatpush2.msra.mxu0 0.0
    %949 = vmatprep.subr.mxu0 0.0
    %950 = vmatpush2.msra.mxu0 0.0
    %951 = vmatprep.subr.mxu0 0.0
    %952 = vmatpush2.msra.mxu0 0.0
    %953 = vmatprep.subr.mxu0 0.0
    %954 = vmatpush2.msra.mxu0 0.0
    %955 = vmatprep.mubr.f32.mxu0 0.0
    %956 = vmatmul.mubr.f32.gmra.mxu0 %v865
    %v957 = vpop.f32.mrf.mxu0
    %v958 = vadd.f32 %v889, %v957
    %v959 = vpop.f32.mrf.mxu0
    %960 = vdwg.mxu0
    %v961 = vmul.f32 %v958, 0.2
    %v962 = vmax.f32 %v958, %v961
    %s963 = scalar_lea.vmem [#allocation11], 768
    %v964 = vld [vmem:[%s963] sm:$0xff]
    %v965 = vld [vmem:[%s963 + $0x8] sm:$0xff]
    %v966 = vld [vmem:[%s963 + $0x10] sm:$0xff]
    %v967 = vld [vmem:[%s963 + $0x18] sm:$0xff]
    %v968 = vld [vmem:[%s963 + $0x20] sm:$0xff]
    %v969 = vld [vmem:[%s963 + $0x28] sm:$0xff]
    %v970 = vld [vmem:[%s963 + $0x30] sm:$0xff]
    %v971 = vld [vmem:[%s963 + $0x38] sm:$0xff]
    %v972 = vld [vmem:[%s963 + $0x40] sm:$0xff]
    %v973 = vld [vmem:[%s963 + $0x48] sm:$0xff]
    %v974 = vld [vmem:[%s963 + $0x50] sm:$0xff]
    %v975 = vld [vmem:[%s963 + $0x58] sm:$0xff]
    %v976 = vld [vmem:[%s963 + $0x60] sm:$0xff]
    %v977 = vld [vmem:[%s963 + $0x68] sm:$0xff]
    %v978 = vld [vmem:[%s963 + $0x70] sm:$0xff]
    %v979 = vld [vmem:[%s963 + $0x78] sm:$0xff]
    %s980 = scalar_lea.vmem %s8, 6
    %v981 = vld [vmem:[%s980] sm:$0x1]
    %v983 = vlaneseq
    %v984 = vshrl.u32 %v983, 7
    %v985 = vsub.s32 0, %v984
    %v986 = vrot.slane %v981, %v985
    %988 = vmatprep.subr.mxu0 0.0
    %989 = vmatpush1.msra.mxu0 %v979
    %990 = vmatprep.subr.mxu0 0.0
    %991 = vmatpush1.msra.mxu0 %v978
    %992 = vmatprep.subr.mxu0 0.0
    %993 = vmatpush1.msra.mxu0 %v977
    %994 = vmatprep.subr.mxu0 0.0
    %995 = vmatpush1.msra.mxu0 %v976
    %996 = vmatprep.subr.mxu0 0.0
    %997 = vmatpush1.msra.mxu0 %v975
    %998 = vmatprep.subr.mxu0 0.0
    %999 = vmatpush1.msra.mxu0 %v974
    %1000 = vmatprep.subr.mxu0 0.0
    %1001 = vmatpush1.msra.mxu0 %v973
    %1002 = vmatprep.subr.mxu0 0.0
    %1003 = vmatpush1.msra.mxu0 %v972
    %1004 = vmatprep.subr.mxu0 0.0
    %1005 = vmatpush1.msra.mxu0 %v971
    %1006 = vmatprep.subr.mxu0 0.0
    %1007 = vmatpush1.msra.mxu0 %v970
    %1008 = vmatprep.subr.mxu0 0.0
    %1009 = vmatpush1.msra.mxu0 %v969
    %1010 = vmatprep.subr.mxu0 0.0
    %1011 = vmatpush1.msra.mxu0 %v968
    %1012 = vmatprep.subr.mxu0 0.0
    %1013 = vmatpush1.msra.mxu0 %v967
    %1014 = vmatprep.subr.mxu0 0.0
    %1015 = vmatpush1.msra.mxu0 %v966
    %1016 = vmatprep.subr.mxu0 0.0
    %1017 = vmatpush1.msra.mxu0 %v965
    %1018 = vmatprep.subr.mxu0 0.0
    %1019 = vmatpush1.msra.mxu0 %v964
    %1020 = vmatprep.subr.mxu0 0.0
    %1021 = vmatpush2.msra.mxu0 0.0
    %1022 = vmatprep.subr.mxu0 0.0
    %1023 = vmatpush2.msra.mxu0 0.0
    %1024 = vmatprep.subr.mxu0 0.0
    %1025 = vmatpush2.msra.mxu0 0.0
    %1026 = vmatprep.subr.mxu0 0.0
    %1027 = vmatpush2.msra.mxu0 0.0
    %1028 = vmatprep.subr.mxu0 0.0
    %1029 = vmatpush2.msra.mxu0 0.0
    %1030 = vmatprep.subr.mxu0 0.0
    %1031 = vmatpush2.msra.mxu0 0.0
    %1032 = vmatprep.subr.mxu0 0.0
    %1033 = vmatpush2.msra.mxu0 0.0
    %1034 = vmatprep.subr.mxu0 0.0
    %1035 = vmatpush2.msra.mxu0 0.0
    %1036 = vmatprep.subr.mxu0 0.0
    %1037 = vmatpush2.msra.mxu0 0.0
    %1038 = vmatprep.subr.mxu0 0.0
    %1039 = vmatpush2.msra.mxu0 0.0
    %1040 = vmatprep.subr.mxu0 0.0
    %1041 = vmatpush2.msra.mxu0 0.0
    %1042 = vmatprep.subr.mxu0 0.0
    %1043 = vmatpush2.msra.mxu0 0.0
    %1044 = vmatprep.subr.mxu0 0.0
    %1045 = vmatpush2.msra.mxu0 0.0
    %1046 = vmatprep.subr.mxu0 0.0
    %1047 = vmatpush2.msra.mxu0 0.0
    %1048 = vmatprep.subr.mxu0 0.0
    %1049 = vmatpush2.msra.mxu0 0.0
    %1050 = vmatprep.subr.mxu0 0.0
    %1051 = vmatpush2.msra.mxu0 0.0
    %1052 = vmatprep.mubr.f32.mxu0 0.0
    %1053 = vmatmul.mubr.f32.gmra.mxu0 %v962
    %v1054 = vpop.f32.mrf.mxu0
    %v1055 = vadd.f32 %v986, %v1054
    %v1056 = vpop.f32.mrf.mxu0
    %1057 = vdwg.mxu0
    %v1058 = vmul.f32 %v1055, 0.2
    %v1059 = vmax.f32 %v1055, %v1058
    %1060 = vst [vmem:[#allocation13] sm:$0xff] %v1059
    // Predicated region
    $region62: #{tpu_custom_call.1} parent=1 // pred_check
      _
    $region63: #{tpu_custom_call.1} parent=1 // pred_check_branch
      %1062 = sbr.rel (0) target = $region65
    $region64: #{tpu_custom_call.1} parent=1 // pred_region
      %s1064 = ssub.s32 128, 128
      %1065 = vsyncadd [#allocation4], %s1064
      %s1067 = sshll.u32 [#allocation13], 4
      %s1068 = int_to_ptr.vmem [resolvable:$true] %s1067
      %1070 = dma.vmem_to_hbm [thread:$0]  %s1068, 128, %s9, [#allocation4]
    $region65: #{tpu_custom_call.1} parent=1 // pred_fallthru
      _
    // Predicated region
    $region66: #{tpu_custom_call.1} parent=1 // pred_check
      _
    $region67: #{tpu_custom_call.1} parent=1 // pred_check_branch
      %1072 = sbr.rel (0) target = $region69
    $region68: #{tpu_custom_call.1} parent=1 // pred_region
      %1073 = dma.done [#allocation4], 128
    $region69: #{tpu_custom_call.1} parent=1 // pred_fallthru
      _
    %1074 = vsyncpa [#allocation3], 1
    %1075 = vsyncpa [#allocation6], 1
    %1076 = vsyncpa [#allocation9], 1
    %1077 = vsyncpa [#allocation12], 1
    %1078 = vsyncpa [#allocation4], 1

// kernel: tpu_custom_call.1
$region0: #{tpu_custom_call.1}
  #allocation0 [shape = 'u32[]', space=smem, size = 0x4, offset = 0x4, fixed_abs, tag = 'smem constant byte address 0x4 - core index']
  #allocation1 [shape = 'u32[144,128]{1,0:T(1,128)}', space=vmem, size = 0x12000, scoped, tag = 'internal scratch']
  %s0 = inlined_call_operand.hbm [shape: f32[8,32], index: 0, kind: input, shape index: {}]
  %s1 = inlined_call_operand.hbm [shape: f32[8,8], index: 1, kind: input, shape index: {}]
  %s2 = inlined_call_operand.hbm [shape: f32[8,128], index: 2, kind: input, shape index: {}]
  %s3 = inlined_call_operand.vmem [shape: f32[1,128], index: 3, kind: input, shape index: {}]
  %s4 = inlined_call_operand.hbm [shape: f32[32,128], index: 4, kind: input, shape index: {}]
  %s5 = inlined_call_operand.hbm [shape: f32[128,128], index: 5, kind: input, shape index: {}]
  %s6 = inlined_call_operand.vmem [shape: f32[1,128], index: 6, kind: input, shape index: {}]
  %s7 = inlined_call_operand.hbm [shape: f32[7,128,128], index: 7, kind: input, shape index: {}]
  %s8 = inlined_call_operand.vmem [shape: f32[7,1,128], index: 8, kind: input, shape index: {}]
  %s9 = inlined_call_operand.hbm [shape: f32[8,128], index: 9, kind: output, shape index: {}]
  %s10 = sld [smem:[#allocation0]]
  $region70: #{tpu_custom_call.1} parent=0
    _
  %s12 = ssub.s32 1, %s10
  %s13 = scalar_select 0, %s12, %s10
  $region1: #{tpu_custom_call.1} parent=0
    #allocation2 [shape = 'u8[4096]{0}', space=vmem, size = 0x1000, scoped, tag = 'input window, operand 0, single buffered']
    #allocation3 [shape = 's32[1]{0}', space=sflag, size = 0x4, scoped, tag = 'scoped memory for tpu_custom_call.1']
    #allocation4 [shape = 's32[1]{0}', space=sflag, size = 0x4, scoped, tag = 'scoped memory for tpu_custom_call.1']
    #allocation5 [shape = 'u8[4096]{0}', space=vmem, size = 0x1000, scoped, tag = 'input window, operand 1, single buffered']
    #allocation6 [shape = 's32[1]{0}', space=sflag, size = 0x4, scoped, tag = 'scoped memory for tpu_custom_call.1']
    #allocation7 [shape = 'u8[4096]{0}', space=vmem, size = 0x1000, scoped, tag = 'input window, operand 2, single buffered']
    #allocation8 [shape = 'u8[16384]{0}', space=vmem, size = 0x4000, scoped, tag = 'input window, operand 4, single buffered']
    #allocation9 [shape = 's32[1]{0}', space=sflag, size = 0x4, scoped, tag = 'scoped memory for tpu_custom_call.1']
    #allocation10 [shape = 'u8[65536]{0}', space=vmem, size = 0x10000, scoped, tag = 'input window, operand 5, single buffered']
    #allocation11 [shape = 'u8[458752]{0}', space=vmem, size = 0x70000, scoped, tag = 'input window, operand 7, single buffered']
    #allocation12 [shape = 's32[1]{0}', space=sflag, size = 0x4, scoped, tag = 'scoped memory for tpu_custom_call.1']
    #allocation13 [shape = 'u8[4096]{0}', space=vmem, size = 0x1000, scoped, tag = 'output window, operand 0, single buffered']
    %14 = vsyncpa [#allocation3], 0
    %15 = vsyncpa [#allocation6], 0
    %16 = vsyncpa [#allocation9], 0
    %17 = vsyncpa [#allocation12], 0
    %18 = vsyncpa [#allocation4], 0
    // Predicated region
    $region2: #{tpu_custom_call.1} parent=1 // pred_check
      _
    $region3: #{tpu_custom_call.1} parent=1 // pred_check_branch
      %20 = sbr.rel (0) target = $region5
    $region4: #{tpu_custom_call.1} parent=1 // pred_region
      %s22 = ssub.s32 128, 128
      %23 = vsyncadd [#allocation3], %s22
      %s25 = sshll.u32 [#allocation2], 4
      %s26 = int_to_ptr.vmem [resolvable:$true] %s25
      %28 = dma.hbm_to_vmem [thread:$0]  %s0, 128, %s26, [#allocation3]
    $region5: #{tpu_custom_call.1} parent=1 // pred_fallthru
      _
    // Predicated region
    $region6: #{tpu_custom_call.1} parent=1 // pred_check
      _
    $region7: #{tpu_custom_call.1} parent=1 // pred_check_branch
      %30 = sbr.rel (0) target = $region9
    $region8: #{tpu_custom_call.1} parent=1 // pred_region
      %s32 = ssub.s32 128, 128
      %33 = vsyncadd [#allocation6], %s32
      %s35 = sshll.u32 [#allocation5], 4
      %s36 = int_to_ptr.vmem [resolvable:$true] %s35
      %38 = dma.hbm_to_vmem [thread:$0]  %s1, 128, %s36, [#allocation6]
    $region9: #{tpu_custom_call.1} parent=1 // pred_fallthru
      _
    // Predicated region
    $region10: #{tpu_custom_call.1} parent=1 // pred_check
      _
    $region11: #{tpu_custom_call.1} parent=1 // pred_check_branch
      %40 = sbr.rel (0) target = $region13
    $region12: #{tpu_custom_call.1} parent=1 // pred_region
      %s42 = ssub.s32 128, 128
      %43 = vsyncadd [#allocation6], %s42
      %s45 = sshll.u32 [#allocation7], 4
      %s46 = int_to_ptr.vmem [resolvable:$true] %s45
      %48 = dma.hbm_to_vmem [thread:$0]  %s2, 128, %s46, [#allocation6]
    $region13: #{tpu_custom_call.1} parent=1 // pred_fallthru
      _
    // Predicated region
    $region14: #{tpu_custom_call.1} parent=1 // pred_check
      _
    $region15: #{tpu_custom_call.1} parent=1 // pred_check_branch
      %50 = sbr.rel (0) target = $region17
    $region16: #{tpu_custom_call.1} parent=1 // pred_region
      _
    $region17: #{tpu_custom_call.1} parent=1 // pred_fallthru
      _
    // Predicated region
    $region18: #{tpu_custom_call.1} parent=1 // pred_check
      _
    $region19: #{tpu_custom_call.1} parent=1 // pred_check_branch
      %52 = sbr.rel (0) target = $region21
    $region20: #{tpu_custom_call.1} parent=1 // pred_region
      %s54 = ssub.s32 512, 512
      %55 = vsyncadd [#allocation9], %s54
      %s56 = sshll.u32 [#allocation8], 4
      %s57 = int_to_ptr.vmem [resolvable:$true] %s56
      %62 = dma.hbm_to_vmem [thread:$0]  %s4, 512, %s57, [#allocation9], 128, 128, 8
    $region21: #{tpu_custom_call.1} parent=1 // pred_fallthru
      _
    // Predicated region
    $region22: #{tpu_custom_call.1} parent=1 // pred_check
      _
    $region23: #{tpu_custom_call.1} parent=1 // pred_check_branch
      %64 = sbr.rel (0) target = $region25
    $region24: #{tpu_custom_call.1} parent=1 // pred_region
      %s66 = ssub.s32 2048, 2048
      %67 = vsyncadd [#allocation9], %s66
      %s68 = sshll.u32 [#allocation10], 4
      %s69 = int_to_ptr.vmem [resolvable:$true] %s68
      %74 = dma.hbm_to_vmem [thread:$0]  %s5, 2048, %s69, [#allocation9], 128, 128, 8
    $region25: #{tpu_custom_call.1} parent=1 // pred_fallthru
      _
    // Predicated region
    $region26: #{tpu_custom_call.1} parent=1 // pred_check
      _
    $region27: #{tpu_custom_call.1} parent=1 // pred_check_branch
      %76 = sbr.rel (0) target = $region29
    $region28: #{tpu_custom_call.1} parent=1 // pred_region
      _
    $region29: #{tpu_custom_call.1} parent=1 // pred_fallthru
      _
    // Predicated region
    $region30: #{tpu_custom_call.1} parent=1 // pred_check
      _
    $region31: #{tpu_custom_call.1} parent=1 // pred_check_branch
      %78 = sbr.rel (0) target = $region33
    $region32: #{tpu_custom_call.1} parent=1 // pred_region
      %s80 = ssub.s32 14336, 14336
      %81 = vsyncadd [#allocation12], %s80
      %s82 = sshll.u32 [#allocation11], 4
      %s83 = int_to_ptr.vmem [resolvable:$true] %s82
      %88 = dma.hbm_to_vmem [thread:$0]  %s7, 14336, %s83, [#allocation12], 128, 128, 8
    $region33: #{tpu_custom_call.1} parent=1 // pred_fallthru
      _
    // Predicated region
    $region34: #{tpu_custom_call.1} parent=1 // pred_check
      _
    $region35: #{tpu_custom_call.1} parent=1 // pred_check_branch
      %90 = sbr.rel (0) target = $region37
    $region36: #{tpu_custom_call.1} parent=1 // pred_region
      _
    $region37: #{tpu_custom_call.1} parent=1 // pred_fallthru
      _
    // Predicated region
    $region38: #{tpu_custom_call.1} parent=1 // pred_check
      _
    $region39: #{tpu_custom_call.1} parent=1 // pred_check_branch
      %92 = sbr.rel (0) target = $region41
    $region40: #{tpu_custom_call.1} parent=1 // pred_region
      %93 = dma.done [#allocation3], 128
    $region41: #{tpu_custom_call.1} parent=1 // pred_fallthru
      _
    // Predicated region
    $region42: #{tpu_custom_call.1} parent=1 // pred_check
      _
    $region43: #{tpu_custom_call.1} parent=1 // pred_check_branch
      %95 = sbr.rel (0) target = $region45
    $region44: #{tpu_custom_call.1} parent=1 // pred_region
      %96 = dma.done [#allocation6], 128
    $region45: #{tpu_custom_call.1} parent=1 // pred_fallthru
      _
    // Predicated region
    $region46: #{tpu_custom_call.1} parent=1 // pred_check
      _
    $region47: #{tpu_custom_call.1} parent=1 // pred_check_branch
      %98 = sbr.rel (0) target = $region49
    $region48: #{tpu_custom_call.1} parent=1 // pred_region
      %99 = dma.done [#allocation6], 128
    $region49: #{tpu_custom_call.1} parent=1 // pred_fallthru
      _
    // Predicated region
    $region50: #{tpu_custom_call.1} parent=1 // pred_check
      _
    $region51: #{tpu_custom_call.1} parent=1 // pred_check_branch
      %101 = sbr.rel (0) target = $region53
    $region52: #{tpu_custom_call.1} parent=1 // pred_region
      %102 = dma.done [#allocation9], 512
    $region53: #{tpu_custom_call.1} parent=1 // pred_fallthru
      _
    // Predicated region
    $region54: #{tpu_custom_call.1} parent=1 // pred_check
      _
    $region55: #{tpu_custom_call.1} parent=1 // pred_check_branch
      %104 = sbr.rel (0) target = $region57
    $region56: #{tpu_custom_call.1} parent=1 // pred_region
      %105 = dma.done [#allocation9], 2048
    $region57: #{tpu_custom_call.1} parent=1 // pred_fallthru
      _
    // Predicated region
    $region58: #{tpu_custom_call.1} parent=1 // pred_check
      _
    $region59: #{tpu_custom_call.1} parent=1 // pred_check_branch
      %107 = sbr.rel (0) target = $region61
    $region60: #{tpu_custom_call.1} parent=1 // pred_region
      %108 = dma.done [#allocation12], 14336
    $region61: #{tpu_custom_call.1} parent=1 // pred_fallthru
      _
    %v109 = vld [vmem:[#allocation2] sm:$0xff]
    %v110 = vmul.f32 %v109, %v109
    %vm111 = vcmask 261120
    %v112 = vsel %vm111, %v110, 0.0
    %113 = vadd.xlane.f32.xlu0 %v112
    %v114 = vpop.xlane.xlu0 %113
    %v115 = vrcp.pop 32.0
    %v116 = vmul.f32 %v114, %v115
    %v117 = vadd.f32 %v116, 1e-08
    %v118 = vrsqrt.pop %v117
    %v119 = vmul.f32 %v109, %v118
    %v120 = vld [vmem:[#allocation8] sm:$0xff]
    %v121 = vld [vmem:[#allocation8 + $0x8] sm:$0xff]
    %v122 = vld [vmem:[#allocation8 + $0x10] sm:$0xff]
    %v123 = vld [vmem:[#allocation8 + $0x18] sm:$0xff]
    %v124 = vld [vmem:[#allocation5] sm:$0xff]
    %v125 = vld [vmem:[#allocation7] sm:$0xff]
    %v126 = vld [vmem:[%s3] sm:$0x1]
    %v128 = vlaneseq
    %v129 = vshrl.u32 %v128, 7
    %v130 = vsub.s32 0, %v129
    %v131 = vrot.slane %v126, %v130
    %vm133 = vcmask 64512
    %v135 = vsel %vm133, %v124, 0
    %137 = vmatprep.subr.mxu0 0.0
    %138 = vmatpush1.msra.mxu0 0.0
    %139 = vmatprep.subr.mxu0 0.0
    %140 = vmatpush1.msra.mxu0 0.0
    %141 = vmatprep.subr.mxu0 0.0
    %142 = vmatpush1.msra.mxu0 0.0
    %143 = vmatprep.subr.mxu0 0.0
    %144 = vmatpush1.msra.mxu0 0.0
    %145 = vmatprep.subr.mxu0 0.0
    %146 = vmatpush1.msra.mxu0 0.0
    %147 = vmatprep.subr.mxu0 0.0
    %148 = vmatpush1.msra.mxu0 0.0
    %149 = vmatprep.subr.mxu0 0.0
    %150 = vmatpush1.msra.mxu0 0.0
    %151 = vmatprep.subr.mxu0 0.0
    %152 = vmatpush1.msra.mxu0 0.0
    %153 = vmatprep.subr.mxu0 0.0
    %154 = vmatpush1.msra.mxu0 0.0
    %155 = vmatprep.subr.mxu0 0.0
    %156 = vmatpush1.msra.mxu0 0.0
    %157 = vmatprep.subr.mxu0 0.0
    %158 = vmatpush1.msra.mxu0 0.0
    %159 = vmatprep.subr.mxu0 0.0
    %160 = vmatpush1.msra.mxu0 0.0
    %161 = vmatprep.subr.mxu0 0.0
    %162 = vmatpush1.msra.mxu0 0.0
    %163 = vmatprep.subr.mxu0 0.0
    %164 = vmatpush1.msra.mxu0 0.0
    %165 = vmatprep.subr.mxu0 0.0
    %166 = vmatpush1.msra.mxu0 0.0
    %167 = vmatprep.subr.mxu0 0.0
    %168 = vmatpush1.msra.mxu0 %v125
    %169 = vmatprep.subr.mxu0 0.0
    %170 = vmatpush2.msra.mxu0 0.0
    %171 = vmatprep.subr.mxu0 0.0
    %172 = vmatpush2.msra.mxu0 0.0
    %173 = vmatprep.subr.mxu0 0.0
    %174 = vmatpush2.msra.mxu0 0.0
    %175 = vmatprep.subr.mxu0 0.0
    %176 = vmatpush2.msra.mxu0 0.0
    %177 = vmatprep.subr.mxu0 0.0
    %178 = vmatpush2.msra.mxu0 0.0
    %179 = vmatprep.subr.mxu0 0.0
    %180 = vmatpush2.msra.mxu0 0.0
    %181 = vmatprep.subr.mxu0 0.0
    %182 = vmatpush2.msra.mxu0 0.0
    %183 = vmatprep.subr.mxu0 0.0
    %184 = vmatpush2.msra.mxu0 0.0
    %185 = vmatprep.subr.mxu0 0.0
    %186 = vmatpush2.msra.mxu0 0.0
    %187 = vmatprep.subr.mxu0 0.0
    %188 = vmatpush2.msra.mxu0 0.0
    %189 = vmatprep.subr.mxu0 0.0
    %190 = vmatpush2.msra.mxu0 0.0
    %191 = vmatprep.subr.mxu0 0.0
    %192 = vmatpush2.msra.mxu0 0.0
    %193 = vmatprep.subr.mxu0 0.0
    %194 = vmatpush2.msra.mxu0 0.0
    %195 = vmatprep.subr.mxu0 0.0
    %196 = vmatpush2.msra.mxu0 0.0
    %197 = vmatprep.subr.mxu0 0.0
    %198 = vmatpush2.msra.mxu0 0.0
    %199 = vmatprep.subr.mxu0 0.0
    %200 = vmatpush2.msra.mxu0 0.0
    %201 = vmatprep.mubr.f32.mxu0 0.0
    %202 = vmatmul.mubr.f32.gmra.mxu0 %v135
    %v203 = vpop.f32.mrf.mxu0
    %v204 = vadd.f32 %v131, %v203
    %v205 = vpop.f32.mrf.mxu0
    %206 = vdwg.mxu0
    %v207 = vmul.f32 %v204, %v204
    %208 = vadd.xlane.f32.xlu0 %v207
    %v209 = vpop.xlane.xlu0 %208
    %v210 = vmul.f32 %v209, 0.03125
    %v211 = vadd.f32 %v210, 1e-08
    %v212 = vrsqrt.pop %v211
    %v213 = vmul.f32 %v204, %v212
    %v214 = vld [vmem:[#allocation10] sm:$0xff]
    %v215 = vld [vmem:[#allocation10 + $0x8] sm:$0xff]
    %v216 = vld [vmem:[#allocation10 + $0x10] sm:$0xff]
    %v217 = vld [vmem:[#allocation10 + $0x18] sm:$0xff]
    %v218 = vld [vmem:[#allocation10 + $0x20] sm:$0xff]
    %v219 = vld [vmem:[#allocation10 + $0x28] sm:$0xff]
    %v220 = vld [vmem:[#allocation10 + $0x30] sm:$0xff]
    %v221 = vld [vmem:[#allocation10 + $0x38] sm:$0xff]
    %v222 = vld [vmem:[#allocation10 + $0x40] sm:$0xff]
    %v223 = vld [vmem:[#allocation10 + $0x48] sm:$0xff]
    %v224 = vld [vmem:[#allocation10 + $0x50] sm:$0xff]
    %v225 = vld [vmem:[#allocation10 + $0x58] sm:$0xff]
    %v226 = vld [vmem:[#allocation10 + $0x60] sm:$0xff]
    %v227 = vld [vmem:[#allocation10 + $0x68] sm:$0xff]
    %v228 = vld [vmem:[#allocation10 + $0x70] sm:$0xff]
    %v229 = vld [vmem:[#allocation10 + $0x78] sm:$0xff]
    %230 = vmatprep.subr.mxu0 0.0
    %231 = vmatpush1.msra.mxu0 %v229
    %232 = vmatprep.subr.mxu0 0.0
    %233 = vmatpush1.msra.mxu0 %v228
    %234 = vmatprep.subr.mxu0 0.0
    %235 = vmatpush1.msra.mxu0 %v227
    %236 = vmatprep.subr.mxu0 0.0
    %237 = vmatpush1.msra.mxu0 %v226
    %238 = vmatprep.subr.mxu0 0.0
    %239 = vmatpush1.msra.mxu0 %v225
    %240 = vmatprep.subr.mxu0 0.0
    %241 = vmatpush1.msra.mxu0 %v224
    %242 = vmatprep.subr.mxu0 0.0
    %243 = vmatpush1.msra.mxu0 %v223
    %244 = vmatprep.subr.mxu0 0.0
    %245 = vmatpush1.msra.mxu0 %v222
    %246 = vmatprep.subr.mxu0 0.0
    %247 = vmatpush1.msra.mxu0 %v221
    %248 = vmatprep.subr.mxu0 0.0
    %249 = vmatpush1.msra.mxu0 %v220
    %250 = vmatprep.subr.mxu0 0.0
    %251 = vmatpush1.msra.mxu0 %v219
    %252 = vmatprep.subr.mxu0 0.0
    %253 = vmatpush1.msra.mxu0 %v218
    %254 = vmatprep.subr.mxu0 0.0
    %255 = vmatpush1.msra.mxu0 %v217
    %256 = vmatprep.subr.mxu0 0.0
    %257 = vmatpush1.msra.mxu0 %v216
    %258 = vmatprep.subr.mxu0 0.0
    %259 = vmatpush1.msra.mxu0 %v215
    %260 = vmatprep.subr.mxu0 0.0
    %261 = vmatpush1.msra.mxu0 %v214
    %262 = vmatprep.subr.mxu0 0.0
    %263 = vmatpush2.msra.mxu0 0.0
    %264 = vmatprep.subr.mxu0 0.0
    %265 = vmatpush2.msra.mxu0 0.0
    %266 = vmatprep.subr.mxu0 0.0
    %267 = vmatpush2.msra.mxu0 0.0
    %268 = vmatprep.subr.mxu0 0.0
    %269 = vmatpush2.msra.mxu0 0.0
    %270 = vmatprep.subr.mxu0 0.0
    %271 = vmatpush2.msra.mxu0 0.0
    %272 = vmatprep.subr.mxu0 0.0
    %273 = vmatpush2.msra.mxu0 0.0
    %274 = vmatprep.subr.mxu0 0.0
    %275 = vmatpush2.msra.mxu0 0.0
    %276 = vmatprep.subr.mxu0 0.0
    %277 = vmatpush2.msra.mxu0 0.0
    %278 = vmatprep.subr.mxu0 0.0
    %279 = vmatpush2.msra.mxu0 0.0
    %280 = vmatprep.subr.mxu0 0.0
    %281 = vmatpush2.msra.mxu0 0.0
    %282 = vmatprep.subr.mxu0 0.0
    %283 = vmatpush2.msra.mxu0 0.0
    %284 = vmatprep.subr.mxu0 0.0
    %285 = vmatpush2.msra.mxu0 0.0
    %286 = vmatprep.subr.mxu0 0.0
    %287 = vmatpush2.msra.mxu0 0.0
    %288 = vmatprep.subr.mxu0 0.0
    %289 = vmatpush2.msra.mxu0 0.0
    %290 = vmatprep.subr.mxu0 0.0
    %291 = vmatpush2.msra.mxu0 0.0
    %292 = vmatprep.subr.mxu0 0.0
    %293 = vmatpush2.msra.mxu0 0.0
    %294 = vmatprep.mubr.f32.mxu0 0.0
    %295 = vmatmul.mubr.f32.gmra.mxu0 %v213
    %v296 = vpop.f32.mrf.mxu0
    %v297 = vadd.f32 0.0, %v296
    %v298 = vpop.f32.mrf.mxu0
    %299 = vdwg.mxu0
    %v301 = vsel %vm111, %v119, 0
    %303 = vmatprep.subr.mxu0 0.0
    %304 = vmatpush1.msra.mxu0 0.0
    %305 = vmatprep.subr.mxu0 0.0
    %306 = vmatpush1.msra.mxu0 0.0
    %307 = vmatprep.subr.mxu0 0.0
    %308 = vmatpush1.msra.mxu0 0.0
    %309 = vmatprep.subr.mxu0 0.0
    %310 = vmatpush1.msra.mxu0 0.0
    %311 = vmatprep.subr.mxu0 0.0
    %312 = vmatpush1.msra.mxu0 0.0
    %313 = vmatprep.subr.mxu0 0.0
    %314 = vmatpush1.msra.mxu0 0.0
    %315 = vmatprep.subr.mxu0 0.0
    %316 = vmatpush1.msra.mxu0 0.0
    %317 = vmatprep.subr.mxu0 0.0
    %318 = vmatpush1.msra.mxu0 0.0
    %319 = vmatprep.subr.mxu0 0.0
    %320 = vmatpush1.msra.mxu0 0.0
    %321 = vmatprep.subr.mxu0 0.0
    %322 = vmatpush1.msra.mxu0 0.0
    %323 = vmatprep.subr.mxu0 0.0
    %324 = vmatpush1.msra.mxu0 0.0
    %325 = vmatprep.subr.mxu0 0.0
    %326 = vmatpush1.msra.mxu0 0.0
    %327 = vmatprep.subr.mxu0 0.0
    %328 = vmatpush1.msra.mxu0 %v123
    %329 = vmatprep.subr.mxu0 0.0
    %330 = vmatpush1.msra.mxu0 %v122
    %331 = vmatprep.subr.mxu0 0.0
    %332 = vmatpush1.msra.mxu0 %v121
    %333 = vmatprep.subr.mxu0 0.0
    %334 = vmatpush1.msra.mxu0 %v120
    %335 = vmatprep.subr.mxu0 0.0
    %336 = vmatpush2.msra.mxu0 0.0
    %337 = vmatprep.subr.mxu0 0.0
    %338 = vmatpush2.msra.mxu0 0.0
    %339 = vmatprep.subr.mxu0 0.0
    %340 = vmatpush2.msra.mxu0 0.0
    %341 = vmatprep.subr.mxu0 0.0
    %342 = vmatpush2.msra.mxu0 0.0
    %343 = vmatprep.subr.mxu0 0.0
    %344 = vmatpush2.msra.mxu0 0.0
    %345 = vmatprep.subr.mxu0 0.0
    %346 = vmatpush2.msra.mxu0 0.0
    %347 = vmatprep.subr.mxu0 0.0
    %348 = vmatpush2.msra.mxu0 0.0
    %349 = vmatprep.subr.mxu0 0.0
    %350 = vmatpush2.msra.mxu0 0.0
    %351 = vmatprep.subr.mxu0 0.0
    %352 = vmatpush2.msra.mxu0 0.0
    %353 = vmatprep.subr.mxu0 0.0
    %354 = vmatpush2.msra.mxu0 0.0
    %355 = vmatprep.subr.mxu0 0.0
    %356 = vmatpush2.msra.mxu0 0.0
    %357 = vmatprep.subr.mxu0 0.0
    %358 = vmatpush2.msra.mxu0 0.0
    %359 = vmatprep.subr.mxu0 0.0
    %360 = vmatpush2.msra.mxu0 0.0
    %361 = vmatprep.subr.mxu0 0.0
    %362 = vmatpush2.msra.mxu0 0.0
    %363 = vmatprep.subr.mxu0 0.0
    %364 = vmatpush2.msra.mxu0 0.0
    %365 = vmatprep.subr.mxu0 0.0
    %366 = vmatpush2.msra.mxu0 0.0
    %367 = vmatprep.mubr.f32.mxu0 0.0
    %368 = vmatmul.mubr.f32.gmra.mxu0 %v301
    %v369 = vpop.f32.mrf.mxu0
    %v370 = vadd.f32 %v297, %v369
    %v371 = vpop.f32.mrf.mxu0
    %372 = vdwg.mxu0
    %v373 = vld [vmem:[%s6] sm:$0x1]
    %v375 = vlaneseq
    %v376 = vshrl.u32 %v375, 7
    %v377 = vsub.s32 0, %v376
    %v378 = vrot.slane %v373, %v377
    %v380 = vadd.f32 %v370, %v378
    %v381 = vmul.f32 %v380, 0.2
    %v382 = vmax.f32 %v380, %v381
    %v383 = vld [vmem:[#allocation11] sm:$0xff]
    %v384 = vld [vmem:[#allocation11 + $0x8] sm:$0xff]
    %v385 = vld [vmem:[#allocation11 + $0x10] sm:$0xff]
    %v386 = vld [vmem:[#allocation11 + $0x18] sm:$0xff]
    %v387 = vld [vmem:[#allocation11 + $0x20] sm:$0xff]
    %v388 = vld [vmem:[#allocation11 + $0x28] sm:$0xff]
    %v389 = vld [vmem:[#allocation11 + $0x30] sm:$0xff]
    %v390 = vld [vmem:[#allocation11 + $0x38] sm:$0xff]
    %v391 = vld [vmem:[#allocation11 + $0x40] sm:$0xff]
    %v392 = vld [vmem:[#allocation11 + $0x48] sm:$0xff]
    %v393 = vld [vmem:[#allocation11 + $0x50] sm:$0xff]
    %v394 = vld [vmem:[#allocation11 + $0x58] sm:$0xff]
    %v395 = vld [vmem:[#allocation11 + $0x60] sm:$0xff]
    %v396 = vld [vmem:[#allocation11 + $0x68] sm:$0xff]
    %v397 = vld [vmem:[#allocation11 + $0x70] sm:$0xff]
    %v398 = vld [vmem:[#allocation11 + $0x78] sm:$0xff]
    %v399 = vld [vmem:[%s8] sm:$0x1]
    %v401 = vlaneseq
    %v402 = vshrl.u32 %v401, 7
    %v403 = vsub.s32 0, %v402
    %v404 = vrot.slane %v399, %v403
    %406 = vmatprep.subr.mxu0 0.0
    %407 = vmatpush1.msra.mxu0 %v398
    %408 = vmatprep.subr.mxu0 0.0
    %409 = vmatpush1.msra.mxu0 %v397
    %410 = vmatprep.subr.mxu0 0.0
    %411 = vmatpush1.msra.mxu0 %v396
    %412 = vmatprep.subr.mxu0 0.0
    %413 = vmatpush1.msra.mxu0 %v395
    %414 = vmatprep.subr.mxu0 0.0
    %415 = vmatpush1.msra.mxu0 %v394
    %416 = vmatprep.subr.mxu0 0.0
    %417 = vmatpush1.msra.mxu0 %v393
    %418 = vmatprep.subr.mxu0 0.0
    %419 = vmatpush1.msra.mxu0 %v392
    %420 = vmatprep.subr.mxu0 0.0
    %421 = vmatpush1.msra.mxu0 %v391
    %422 = vmatprep.subr.mxu0 0.0
    %423 = vmatpush1.msra.mxu0 %v390
    %424 = vmatprep.subr.mxu0 0.0
    %425 = vmatpush1.msra.mxu0 %v389
    %426 = vmatprep.subr.mxu0 0.0
    %427 = vmatpush1.msra.mxu0 %v388
    %428 = vmatprep.subr.mxu0 0.0
    %429 = vmatpush1.msra.mxu0 %v387
    %430 = vmatprep.subr.mxu0 0.0
    %431 = vmatpush1.msra.mxu0 %v386
    %432 = vmatprep.subr.mxu0 0.0
    %433 = vmatpush1.msra.mxu0 %v385
    %434 = vmatprep.subr.mxu0 0.0
    %435 = vmatpush1.msra.mxu0 %v384
    %436 = vmatprep.subr.mxu0 0.0
    %437 = vmatpush1.msra.mxu0 %v383
    %438 = vmatprep.subr.mxu0 0.0
    %439 = vmatpush2.msra.mxu0 0.0
    %440 = vmatprep.subr.mxu0 0.0
    %441 = vmatpush2.msra.mxu0 0.0
    %442 = vmatprep.subr.mxu0 0.0
    %443 = vmatpush2.msra.mxu0 0.0
    %444 = vmatprep.subr.mxu0 0.0
    %445 = vmatpush2.msra.mxu0 0.0
    %446 = vmatprep.subr.mxu0 0.0
    %447 = vmatpush2.msra.mxu0 0.0
    %448 = vmatprep.subr.mxu0 0.0
    %449 = vmatpush2.msra.mxu0 0.0
    %450 = vmatprep.subr.mxu0 0.0
    %451 = vmatpush2.msra.mxu0 0.0
    %452 = vmatprep.subr.mxu0 0.0
    %453 = vmatpush2.msra.mxu0 0.0
    %454 = vmatprep.subr.mxu0 0.0
    %455 = vmatpush2.msra.mxu0 0.0
    %456 = vmatprep.subr.mxu0 0.0
    %457 = vmatpush2.msra.mxu0 0.0
    %458 = vmatprep.subr.mxu0 0.0
    %459 = vmatpush2.msra.mxu0 0.0
    %460 = vmatprep.subr.mxu0 0.0
    %461 = vmatpush2.msra.mxu0 0.0
    %462 = vmatprep.subr.mxu0 0.0
    %463 = vmatpush2.msra.mxu0 0.0
    %464 = vmatprep.subr.mxu0 0.0
    %465 = vmatpush2.msra.mxu0 0.0
    %466 = vmatprep.subr.mxu0 0.0
    %467 = vmatpush2.msra.mxu0 0.0
    %468 = vmatprep.subr.mxu0 0.0
    %469 = vmatpush2.msra.mxu0 0.0
    %470 = vmatprep.mubr.f32.mxu0 0.0
    %471 = vmatmul.mubr.f32.gmra.mxu0 %v382
    %v472 = vpop.f32.mrf.mxu0
    %v473 = vadd.f32 %v404, %v472
    %v474 = vpop.f32.mrf.mxu0
    %475 = vdwg.mxu0
    %v476 = vmul.f32 %v473, 0.2
    %v477 = vmax.f32 %v473, %v476
    %s478 = scalar_lea.vmem [#allocation11], 128
    %v479 = vld [vmem:[%s478] sm:$0xff]
    %v480 = vld [vmem:[%s478 + $0x8] sm:$0xff]
    %v481 = vld [vmem:[%s478 + $0x10] sm:$0xff]
    %v482 = vld [vmem:[%s478 + $0x18] sm:$0xff]
    %v483 = vld [vmem:[%s478 + $0x20] sm:$0xff]
    %v484 = vld [vmem:[%s478 + $0x28] sm:$0xff]
    %v485 = vld [vmem:[%s478 + $0x30] sm:$0xff]
    %v486 = vld [vmem:[%s478 + $0x38] sm:$0xff]
    %v487 = vld [vmem:[%s478 + $0x40] sm:$0xff]
    %v488 = vld [vmem:[%s478 + $0x48] sm:$0xff]
    %v489 = vld [vmem:[%s478 + $0x50] sm:$0xff]
    %v490 = vld [vmem:[%s478 + $0x58] sm:$0xff]
    %v491 = vld [vmem:[%s478 + $0x60] sm:$0xff]
    %v492 = vld [vmem:[%s478 + $0x68] sm:$0xff]
    %v493 = vld [vmem:[%s478 + $0x70] sm:$0xff]
    %v494 = vld [vmem:[%s478 + $0x78] sm:$0xff]
    %s495 = scalar_lea.vmem %s8, 1
    %v496 = vld [vmem:[%s495] sm:$0x1]
    %v498 = vlaneseq
    %v499 = vshrl.u32 %v498, 7
    %v500 = vsub.s32 0, %v499
    %v501 = vrot.slane %v496, %v500
    %503 = vmatprep.subr.mxu0 0.0
    %504 = vmatpush1.msra.mxu0 %v494
    %505 = vmatprep.subr.mxu0 0.0
    %506 = vmatpush1.msra.mxu0 %v493
    %507 = vmatprep.subr.mxu0 0.0
    %508 = vmatpush1.msra.mxu0 %v492
    %509 = vmatprep.subr.mxu0 0.0
    %510 = vmatpush1.msra.mxu0 %v491
    %511 = vmatprep.subr.mxu0 0.0
    %512 = vmatpush1.msra.mxu0 %v490
    %513 = vmatprep.subr.mxu0 0.0
    %514 = vmatpush1.msra.mxu0 %v489
    %515 = vmatprep.subr.mxu0 0.0
    %516 = vmatpush1.msra.mxu0 %v488
    %517 = vmatprep.subr.mxu0 0.0
    %518 = vmatpush1.msra.mxu0 %v487
    %519 = vmatprep.subr.mxu0 0.0
    %520 = vmatpush1.msra.mxu0 %v486
    %521 = vmatprep.subr.mxu0 0.0
    %522 = vmatpush1.msra.mxu0 %v485
    %523 = vmatprep.subr.mxu0 0.0
    %524 = vmatpush1.msra.mxu0 %v484
    %525 = vmatprep.subr.mxu0 0.0
    %526 = vmatpush1.msra.mxu0 %v483
    %527 = vmatprep.subr.mxu0 0.0
    %528 = vmatpush1.msra.mxu0 %v482
    %529 = vmatprep.subr.mxu0 0.0
    %530 = vmatpush1.msra.mxu0 %v481
    %531 = vmatprep.subr.mxu0 0.0
    %532 = vmatpush1.msra.mxu0 %v480
    %533 = vmatprep.subr.mxu0 0.0
    %534 = vmatpush1.msra.mxu0 %v479
    %535 = vmatprep.subr.mxu0 0.0
    %536 = vmatpush2.msra.mxu0 0.0
    %537 = vmatprep.subr.mxu0 0.0
    %538 = vmatpush2.msra.mxu0 0.0
    %539 = vmatprep.subr.mxu0 0.0
    %540 = vmatpush2.msra.mxu0 0.0
    %541 = vmatprep.subr.mxu0 0.0
    %542 = vmatpush2.msra.mxu0 0.0
    %543 = vmatprep.subr.mxu0 0.0
    %544 = vmatpush2.msra.mxu0 0.0
    %545 = vmatprep.subr.mxu0 0.0
    %546 = vmatpush2.msra.mxu0 0.0
    %547 = vmatprep.subr.mxu0 0.0
    %548 = vmatpush2.msra.mxu0 0.0
    %549 = vmatprep.subr.mxu0 0.0
    %550 = vmatpush2.msra.mxu0 0.0
    %551 = vmatprep.subr.mxu0 0.0
    %552 = vmatpush2.msra.mxu0 0.0
    %553 = vmatprep.subr.mxu0 0.0
    %554 = vmatpush2.msra.mxu0 0.0
    %555 = vmatprep.subr.mxu0 0.0
    %556 = vmatpush2.msra.mxu0 0.0
    %557 = vmatprep.subr.mxu0 0.0
    %558 = vmatpush2.msra.mxu0 0.0
    %559 = vmatprep.subr.mxu0 0.0
    %560 = vmatpush2.msra.mxu0 0.0
    %561 = vmatprep.subr.mxu0 0.0
    %562 = vmatpush2.msra.mxu0 0.0
    %563 = vmatprep.subr.mxu0 0.0
    %564 = vmatpush2.msra.mxu0 0.0
    %565 = vmatprep.subr.mxu0 0.0
    %566 = vmatpush2.msra.mxu0 0.0
    %567 = vmatprep.mubr.f32.mxu0 0.0
    %568 = vmatmul.mubr.f32.gmra.mxu0 %v477
    %v569 = vpop.f32.mrf.mxu0
    %v570 = vadd.f32 %v501, %v569
    %v571 = vpop.f32.mrf.mxu0
    %572 = vdwg.mxu0
    %v573 = vmul.f32 %v570, 0.2
    %v574 = vmax.f32 %v570, %v573
    %s575 = scalar_lea.vmem [#allocation11], 256
    %v576 = vld [vmem:[%s575] sm:$0xff]
    %v577 = vld [vmem:[%s575 + $0x8] sm:$0xff]
    %v578 = vld [vmem:[%s575 + $0x10] sm:$0xff]
    %v579 = vld [vmem:[%s575 + $0x18] sm:$0xff]
    %v580 = vld [vmem:[%s575 + $0x20] sm:$0xff]
    %v581 = vld [vmem:[%s575 + $0x28] sm:$0xff]
    %v582 = vld [vmem:[%s575 + $0x30] sm:$0xff]
    %v583 = vld [vmem:[%s575 + $0x38] sm:$0xff]
    %v584 = vld [vmem:[%s575 + $0x40] sm:$0xff]
    %v585 = vld [vmem:[%s575 + $0x48] sm:$0xff]
    %v586 = vld [vmem:[%s575 + $0x50] sm:$0xff]
    %v587 = vld [vmem:[%s575 + $0x58] sm:$0xff]
    %v588 = vld [vmem:[%s575 + $0x60] sm:$0xff]
    %v589 = vld [vmem:[%s575 + $0x68] sm:$0xff]
    %v590 = vld [vmem:[%s575 + $0x70] sm:$0xff]
    %v591 = vld [vmem:[%s575 + $0x78] sm:$0xff]
    %s592 = scalar_lea.vmem %s8, 2
    %v593 = vld [vmem:[%s592] sm:$0x1]
    %v595 = vlaneseq
    %v596 = vshrl.u32 %v595, 7
    %v597 = vsub.s32 0, %v596
    %v598 = vrot.slane %v593, %v597
    %600 = vmatprep.subr.mxu0 0.0
    %601 = vmatpush1.msra.mxu0 %v591
    %602 = vmatprep.subr.mxu0 0.0
    %603 = vmatpush1.msra.mxu0 %v590
    %604 = vmatprep.subr.mxu0 0.0
    %605 = vmatpush1.msra.mxu0 %v589
    %606 = vmatprep.subr.mxu0 0.0
    %607 = vmatpush1.msra.mxu0 %v588
    %608 = vmatprep.subr.mxu0 0.0
    %609 = vmatpush1.msra.mxu0 %v587
    %610 = vmatprep.subr.mxu0 0.0
    %611 = vmatpush1.msra.mxu0 %v586
    %612 = vmatprep.subr.mxu0 0.0
    %613 = vmatpush1.msra.mxu0 %v585
    %614 = vmatprep.subr.mxu0 0.0
    %615 = vmatpush1.msra.mxu0 %v584
    %616 = vmatprep.subr.mxu0 0.0
    %617 = vmatpush1.msra.mxu0 %v583
    %618 = vmatprep.subr.mxu0 0.0
    %619 = vmatpush1.msra.mxu0 %v582
    %620 = vmatprep.subr.mxu0 0.0
    %621 = vmatpush1.msra.mxu0 %v581
    %622 = vmatprep.subr.mxu0 0.0
    %623 = vmatpush1.msra.mxu0 %v580
    %624 = vmatprep.subr.mxu0 0.0
    %625 = vmatpush1.msra.mxu0 %v579
    %626 = vmatprep.subr.mxu0 0.0
    %627 = vmatpush1.msra.mxu0 %v578
    %628 = vmatprep.subr.mxu0 0.0
    %629 = vmatpush1.msra.mxu0 %v577
    %630 = vmatprep.subr.mxu0 0.0
    %631 = vmatpush1.msra.mxu0 %v576
    %632 = vmatprep.subr.mxu0 0.0
    %633 = vmatpush2.msra.mxu0 0.0
    %634 = vmatprep.subr.mxu0 0.0
    %635 = vmatpush2.msra.mxu0 0.0
    %636 = vmatprep.subr.mxu0 0.0
    %637 = vmatpush2.msra.mxu0 0.0
    %638 = vmatprep.subr.mxu0 0.0
    %639 = vmatpush2.msra.mxu0 0.0
    %640 = vmatprep.subr.mxu0 0.0
    %641 = vmatpush2.msra.mxu0 0.0
    %642 = vmatprep.subr.mxu0 0.0
    %643 = vmatpush2.msra.mxu0 0.0
    %644 = vmatprep.subr.mxu0 0.0
    %645 = vmatpush2.msra.mxu0 0.0
    %646 = vmatprep.subr.mxu0 0.0
    %647 = vmatpush2.msra.mxu0 0.0
    %648 = vmatprep.subr.mxu0 0.0
    %649 = vmatpush2.msra.mxu0 0.0
    %650 = vmatprep.subr.mxu0 0.0
    %651 = vmatpush2.msra.mxu0 0.0
    %652 = vmatprep.subr.mxu0 0.0
    %653 = vmatpush2.msra.mxu0 0.0
    %654 = vmatprep.subr.mxu0 0.0
    %655 = vmatpush2.msra.mxu0 0.0
    %656 = vmatprep.subr.mxu0 0.0
    %657 = vmatpush2.msra.mxu0 0.0
    %658 = vmatprep.subr.mxu0 0.0
    %659 = vmatpush2.msra.mxu0 0.0
    %660 = vmatprep.subr.mxu0 0.0
    %661 = vmatpush2.msra.mxu0 0.0
    %662 = vmatprep.subr.mxu0 0.0
    %663 = vmatpush2.msra.mxu0 0.0
    %664 = vmatprep.mubr.f32.mxu0 0.0
    %665 = vmatmul.mubr.f32.gmra.mxu0 %v574
    %v666 = vpop.f32.mrf.mxu0
    %v667 = vadd.f32 %v598, %v666
    %v668 = vpop.f32.mrf.mxu0
    %669 = vdwg.mxu0
    %v670 = vmul.f32 %v667, 0.2
    %v671 = vmax.f32 %v667, %v670
    %s672 = scalar_lea.vmem [#allocation11], 384
    %v673 = vld [vmem:[%s672] sm:$0xff]
    %v674 = vld [vmem:[%s672 + $0x8] sm:$0xff]
    %v675 = vld [vmem:[%s672 + $0x10] sm:$0xff]
    %v676 = vld [vmem:[%s672 + $0x18] sm:$0xff]
    %v677 = vld [vmem:[%s672 + $0x20] sm:$0xff]
    %v678 = vld [vmem:[%s672 + $0x28] sm:$0xff]
    %v679 = vld [vmem:[%s672 + $0x30] sm:$0xff]
    %v680 = vld [vmem:[%s672 + $0x38] sm:$0xff]
    %v681 = vld [vmem:[%s672 + $0x40] sm:$0xff]
    %v682 = vld [vmem:[%s672 + $0x48] sm:$0xff]
    %v683 = vld [vmem:[%s672 + $0x50] sm:$0xff]
    %v684 = vld [vmem:[%s672 + $0x58] sm:$0xff]
    %v685 = vld [vmem:[%s672 + $0x60] sm:$0xff]
    %v686 = vld [vmem:[%s672 + $0x68] sm:$0xff]
    %v687 = vld [vmem:[%s672 + $0x70] sm:$0xff]
    %v688 = vld [vmem:[%s672 + $0x78] sm:$0xff]
    %s689 = scalar_lea.vmem %s8, 3
    %v690 = vld [vmem:[%s689] sm:$0x1]
    %v692 = vlaneseq
    %v693 = vshrl.u32 %v692, 7
    %v694 = vsub.s32 0, %v693
    %v695 = vrot.slane %v690, %v694
    %697 = vmatprep.subr.mxu0 0.0
    %698 = vmatpush1.msra.mxu0 %v688
    %699 = vmatprep.subr.mxu0 0.0
    %700 = vmatpush1.msra.mxu0 %v687
    %701 = vmatprep.subr.mxu0 0.0
    %702 = vmatpush1.msra.mxu0 %v686
    %703 = vmatprep.subr.mxu0 0.0
    %704 = vmatpush1.msra.mxu0 %v685
    %705 = vmatprep.subr.mxu0 0.0
    %706 = vmatpush1.msra.mxu0 %v684
    %707 = vmatprep.subr.mxu0 0.0
    %708 = vmatpush1.msra.mxu0 %v683
    %709 = vmatprep.subr.mxu0 0.0
    %710 = vmatpush1.msra.mxu0 %v682
    %711 = vmatprep.subr.mxu0 0.0
    %712 = vmatpush1.msra.mxu0 %v681
    %713 = vmatprep.subr.mxu0 0.0
    %714 = vmatpush1.msra.mxu0 %v680
    %715 = vmatprep.subr.mxu0 0.0
    %716 = vmatpush1.msra.mxu0 %v679
    %717 = vmatprep.subr.mxu0 0.0
    %718 = vmatpush1.msra.mxu0 %v678
    %719 = vmatprep.subr.mxu0 0.0
    %720 = vmatpush1.msra.mxu0 %v677
    %721 = vmatprep.subr.mxu0 0.0
    %722 = vmatpush1.msra.mxu0 %v676
    %723 = vmatprep.subr.mxu0 0.0
    %724 = vmatpush1.msra.mxu0 %v675
    %725 = vmatprep.subr.mxu0 0.0
    %726 = vmatpush1.msra.mxu0 %v674
    %727 = vmatprep.subr.mxu0 0.0
    %728 = vmatpush1.msra.mxu0 %v673
    %729 = vmatprep.subr.mxu0 0.0
    %730 = vmatpush2.msra.mxu0 0.0
    %731 = vmatprep.subr.mxu0 0.0
    %732 = vmatpush2.msra.mxu0 0.0
    %733 = vmatprep.subr.mxu0 0.0
    %734 = vmatpush2.msra.mxu0 0.0
    %735 = vmatprep.subr.mxu0 0.0
    %736 = vmatpush2.msra.mxu0 0.0
    %737 = vmatprep.subr.mxu0 0.0
    %738 = vmatpush2.msra.mxu0 0.0
    %739 = vmatprep.subr.mxu0 0.0
    %740 = vmatpush2.msra.mxu0 0.0
    %741 = vmatprep.subr.mxu0 0.0
    %742 = vmatpush2.msra.mxu0 0.0
    %743 = vmatprep.subr.mxu0 0.0
    %744 = vmatpush2.msra.mxu0 0.0
    %745 = vmatprep.subr.mxu0 0.0
    %746 = vmatpush2.msra.mxu0 0.0
    %747 = vmatprep.subr.mxu0 0.0
    %748 = vmatpush2.msra.mxu0 0.0
    %749 = vmatprep.subr.mxu0 0.0
    %750 = vmatpush2.msra.mxu0 0.0
    %751 = vmatprep.subr.mxu0 0.0
    %752 = vmatpush2.msra.mxu0 0.0
    %753 = vmatprep.subr.mxu0 0.0
    %754 = vmatpush2.msra.mxu0 0.0
    %755 = vmatprep.subr.mxu0 0.0
    %756 = vmatpush2.msra.mxu0 0.0
    %757 = vmatprep.subr.mxu0 0.0
    %758 = vmatpush2.msra.mxu0 0.0
    %759 = vmatprep.subr.mxu0 0.0
    %760 = vmatpush2.msra.mxu0 0.0
    %761 = vmatprep.mubr.f32.mxu0 0.0
    %762 = vmatmul.mubr.f32.gmra.mxu0 %v671
    %v763 = vpop.f32.mrf.mxu0
    %v764 = vadd.f32 %v695, %v763
    %v765 = vpop.f32.mrf.mxu0
    %766 = vdwg.mxu0
    %v767 = vmul.f32 %v764, 0.2
    %v768 = vmax.f32 %v764, %v767
    %s769 = scalar_lea.vmem [#allocation11], 512
    %v770 = vld [vmem:[%s769] sm:$0xff]
    %v771 = vld [vmem:[%s769 + $0x8] sm:$0xff]
    %v772 = vld [vmem:[%s769 + $0x10] sm:$0xff]
    %v773 = vld [vmem:[%s769 + $0x18] sm:$0xff]
    %v774 = vld [vmem:[%s769 + $0x20] sm:$0xff]
    %v775 = vld [vmem:[%s769 + $0x28] sm:$0xff]
    %v776 = vld [vmem:[%s769 + $0x30] sm:$0xff]
    %v777 = vld [vmem:[%s769 + $0x38] sm:$0xff]
    %v778 = vld [vmem:[%s769 + $0x40] sm:$0xff]
    %v779 = vld [vmem:[%s769 + $0x48] sm:$0xff]
    %v780 = vld [vmem:[%s769 + $0x50] sm:$0xff]
    %v781 = vld [vmem:[%s769 + $0x58] sm:$0xff]
    %v782 = vld [vmem:[%s769 + $0x60] sm:$0xff]
    %v783 = vld [vmem:[%s769 + $0x68] sm:$0xff]
    %v784 = vld [vmem:[%s769 + $0x70] sm:$0xff]
    %v785 = vld [vmem:[%s769 + $0x78] sm:$0xff]
    %s786 = scalar_lea.vmem %s8, 4
    %v787 = vld [vmem:[%s786] sm:$0x1]
    %v789 = vlaneseq
    %v790 = vshrl.u32 %v789, 7
    %v791 = vsub.s32 0, %v790
    %v792 = vrot.slane %v787, %v791
    %794 = vmatprep.subr.mxu0 0.0
    %795 = vmatpush1.msra.mxu0 %v785
    %796 = vmatprep.subr.mxu0 0.0
    %797 = vmatpush1.msra.mxu0 %v784
    %798 = vmatprep.subr.mxu0 0.0
    %799 = vmatpush1.msra.mxu0 %v783
    %800 = vmatprep.subr.mxu0 0.0
    %801 = vmatpush1.msra.mxu0 %v782
    %802 = vmatprep.subr.mxu0 0.0
    %803 = vmatpush1.msra.mxu0 %v781
    %804 = vmatprep.subr.mxu0 0.0
    %805 = vmatpush1.msra.mxu0 %v780
    %806 = vmatprep.subr.mxu0 0.0
    %807 = vmatpush1.msra.mxu0 %v779
    %808 = vmatprep.subr.mxu0 0.0
    %809 = vmatpush1.msra.mxu0 %v778
    %810 = vmatprep.subr.mxu0 0.0
    %811 = vmatpush1.msra.mxu0 %v777
    %812 = vmatprep.subr.mxu0 0.0
    %813 = vmatpush1.msra.mxu0 %v776
    %814 = vmatprep.subr.mxu0 0.0
    %815 = vmatpush1.msra.mxu0 %v775
    %816 = vmatprep.subr.mxu0 0.0
    %817 = vmatpush1.msra.mxu0 %v774
    %818 = vmatprep.subr.mxu0 0.0
    %819 = vmatpush1.msra.mxu0 %v773
    %820 = vmatprep.subr.mxu0 0.0
    %821 = vmatpush1.msra.mxu0 %v772
    %822 = vmatprep.subr.mxu0 0.0
    %823 = vmatpush1.msra.mxu0 %v771
    %824 = vmatprep.subr.mxu0 0.0
    %825 = vmatpush1.msra.mxu0 %v770
    %826 = vmatprep.subr.mxu0 0.0
    %827 = vmatpush2.msra.mxu0 0.0
    %828 = vmatprep.subr.mxu0 0.0
    %829 = vmatpush2.msra.mxu0 0.0
    %830 = vmatprep.subr.mxu0 0.0
    %831 = vmatpush2.msra.mxu0 0.0
    %832 = vmatprep.subr.mxu0 0.0
    %833 = vmatpush2.msra.mxu0 0.0
    %834 = vmatprep.subr.mxu0 0.0
    %835 = vmatpush2.msra.mxu0 0.0
    %836 = vmatprep.subr.mxu0 0.0
    %837 = vmatpush2.msra.mxu0 0.0
    %838 = vmatprep.subr.mxu0 0.0
    %839 = vmatpush2.msra.mxu0 0.0
    %840 = vmatprep.subr.mxu0 0.0
    %841 = vmatpush2.msra.mxu0 0.0
    %842 = vmatprep.subr.mxu0 0.0
    %843 = vmatpush2.msra.mxu0 0.0
    %844 = vmatprep.subr.mxu0 0.0
    %845 = vmatpush2.msra.mxu0 0.0
    %846 = vmatprep.subr.mxu0 0.0
    %847 = vmatpush2.msra.mxu0 0.0
    %848 = vmatprep.subr.mxu0 0.0
    %849 = vmatpush2.msra.mxu0 0.0
    %850 = vmatprep.subr.mxu0 0.0
    %851 = vmatpush2.msra.mxu0 0.0
    %852 = vmatprep.subr.mxu0 0.0
    %853 = vmatpush2.msra.mxu0 0.0
    %854 = vmatprep.subr.mxu0 0.0
    %855 = vmatpush2.msra.mxu0 0.0
    %856 = vmatprep.subr.mxu0 0.0
    %857 = vmatpush2.msra.mxu0 0.0
    %858 = vmatprep.mubr.f32.mxu0 0.0
    %859 = vmatmul.mubr.f32.gmra.mxu0 %v768
    %v860 = vpop.f32.mrf.mxu0
    %v861 = vadd.f32 %v792, %v860
    %v862 = vpop.f32.mrf.mxu0
    %863 = vdwg.mxu0
    %v864 = vmul.f32 %v861, 0.2
    %v865 = vmax.f32 %v861, %v864
    %s866 = scalar_lea.vmem [#allocation11], 640
    %v867 = vld [vmem:[%s866] sm:$0xff]
    %v868 = vld [vmem:[%s866 + $0x8] sm:$0xff]
    %v869 = vld [vmem:[%s866 + $0x10] sm:$0xff]
    %v870 = vld [vmem:[%s866 + $0x18] sm:$0xff]
    %v871 = vld [vmem:[%s866 + $0x20] sm:$0xff]
    %v872 = vld [vmem:[%s866 + $0x28] sm:$0xff]
    %v873 = vld [vmem:[%s866 + $0x30] sm:$0xff]
    %v874 = vld [vmem:[%s866 + $0x38] sm:$0xff]
    %v875 = vld [vmem:[%s866 + $0x40] sm:$0xff]
    %v876 = vld [vmem:[%s866 + $0x48] sm:$0xff]
    %v877 = vld [vmem:[%s866 + $0x50] sm:$0xff]
    %v878 = vld [vmem:[%s866 + $0x58] sm:$0xff]
    %v879 = vld [vmem:[%s866 + $0x60] sm:$0xff]
    %v880 = vld [vmem:[%s866 + $0x68] sm:$0xff]
    %v881 = vld [vmem:[%s866 + $0x70] sm:$0xff]
    %v882 = vld [vmem:[%s866 + $0x78] sm:$0xff]
    %s883 = scalar_lea.vmem %s8, 5
    %v884 = vld [vmem:[%s883] sm:$0x1]
    %v886 = vlaneseq
    %v887 = vshrl.u32 %v886, 7
    %v888 = vsub.s32 0, %v887
    %v889 = vrot.slane %v884, %v888
    %891 = vmatprep.subr.mxu0 0.0
    %892 = vmatpush1.msra.mxu0 %v882
    %893 = vmatprep.subr.mxu0 0.0
    %894 = vmatpush1.msra.mxu0 %v881
    %895 = vmatprep.subr.mxu0 0.0
    %896 = vmatpush1.msra.mxu0 %v880
    %897 = vmatprep.subr.mxu0 0.0
    %898 = vmatpush1.msra.mxu0 %v879
    %899 = vmatprep.subr.mxu0 0.0
    %900 = vmatpush1.msra.mxu0 %v878
    %901 = vmatprep.subr.mxu0 0.0
    %902 = vmatpush1.msra.mxu0 %v877
    %903 = vmatprep.subr.mxu0 0.0
    %904 = vmatpush1.msra.mxu0 %v876
    %905 = vmatprep.subr.mxu0 0.0
    %906 = vmatpush1.msra.mxu0 %v875
    %907 = vmatprep.subr.mxu0 0.0
    %908 = vmatpush1.msra.mxu0 %v874
    %909 = vmatprep.subr.mxu0 0.0
    %910 = vmatpush1.msra.mxu0 %v873
    %911 = vmatprep.subr.mxu0 0.0
    %912 = vmatpush1.msra.mxu0 %v872
    %913 = vmatprep.subr.mxu0 0.0
    %914 = vmatpush1.msra.mxu0 %v871
    %915 = vmatprep.subr.mxu0 0.0
    %916 = vmatpush1.msra.mxu0 %v870
    %917 = vmatprep.subr.mxu0 0.0
    %918 = vmatpush1.msra.mxu0 %v869
    %919 = vmatprep.subr.mxu0 0.0
    %920 = vmatpush1.msra.mxu0 %v868
    %921 = vmatprep.subr.mxu0 0.0
    %922 = vmatpush1.msra.mxu0 %v867
    %923 = vmatprep.subr.mxu0 0.0
    %924 = vmatpush2.msra.mxu0 0.0
    %925 = vmatprep.subr.mxu0 0.0
    %926 = vmatpush2.msra.mxu0 0.0
    %927 = vmatprep.subr.mxu0 0.0
    %928 = vmatpush2.msra.mxu0 0.0
    %929 = vmatprep.subr.mxu0 0.0
    %930 = vmatpush2.msra.mxu0 0.0
    %931 = vmatprep.subr.mxu0 0.0
    %932 = vmatpush2.msra.mxu0 0.0
    %933 = vmatprep.subr.mxu0 0.0
    %934 = vmatpush2.msra.mxu0 0.0
    %935 = vmatprep.subr.mxu0 0.0
    %936 = vmatpush2.msra.mxu0 0.0
    %937 = vmatprep.subr.mxu0 0.0
    %938 = vmatpush2.msra.mxu0 0.0
    %939 = vmatprep.subr.mxu0 0.0
    %940 = vmatpush2.msra.mxu0 0.0
    %941 = vmatprep.subr.mxu0 0.0
    %942 = vmatpush2.msra.mxu0 0.0
    %943 = vmatprep.subr.mxu0 0.0
    %944 = vmatpush2.msra.mxu0 0.0
    %945 = vmatprep.subr.mxu0 0.0
    %946 = vmatpush2.msra.mxu0 0.0
    %947 = vmatprep.subr.mxu0 0.0
    %948 = vmatpush2.msra.mxu0 0.0
    %949 = vmatprep.subr.mxu0 0.0
    %950 = vmatpush2.msra.mxu0 0.0
    %951 = vmatprep.subr.mxu0 0.0
    %952 = vmatpush2.msra.mxu0 0.0
    %953 = vmatprep.subr.mxu0 0.0
    %954 = vmatpush2.msra.mxu0 0.0
    %955 = vmatprep.mubr.f32.mxu0 0.0
    %956 = vmatmul.mubr.f32.gmra.mxu0 %v865
    %v957 = vpop.f32.mrf.mxu0
    %v958 = vadd.f32 %v889, %v957
    %v959 = vpop.f32.mrf.mxu0
    %960 = vdwg.mxu0
    %v961 = vmul.f32 %v958, 0.2
    %v962 = vmax.f32 %v958, %v961
    %s963 = scalar_lea.vmem [#allocation11], 768
    %v964 = vld [vmem:[%s963] sm:$0xff]
    %v965 = vld [vmem:[%s963 + $0x8] sm:$0xff]
    %v966 = vld [vmem:[%s963 + $0x10] sm:$0xff]
    %v967 = vld [vmem:[%s963 + $0x18] sm:$0xff]
    %v968 = vld [vmem:[%s963 + $0x20] sm:$0xff]
    %v969 = vld [vmem:[%s963 + $0x28] sm:$0xff]
    %v970 = vld [vmem:[%s963 + $0x30] sm:$0xff]
    %v971 = vld [vmem:[%s963 + $0x38] sm:$0xff]
    %v972 = vld [vmem:[%s963 + $0x40] sm:$0xff]
    %v973 = vld [vmem:[%s963 + $0x48] sm:$0xff]
    %v974 = vld [vmem:[%s963 + $0x50] sm:$0xff]
    %v975 = vld [vmem:[%s963 + $0x58] sm:$0xff]
    %v976 = vld [vmem:[%s963 + $0x60] sm:$0xff]
    %v977 = vld [vmem:[%s963 + $0x68] sm:$0xff]
    %v978 = vld [vmem:[%s963 + $0x70] sm:$0xff]
    %v979 = vld [vmem:[%s963 + $0x78] sm:$0xff]
    %s980 = scalar_lea.vmem %s8, 6
    %v981 = vld [vmem:[%s980] sm:$0x1]
    %v983 = vlaneseq
    %v984 = vshrl.u32 %v983, 7
    %v985 = vsub.s32 0, %v984
    %v986 = vrot.slane %v981, %v985
    %988 = vmatprep.subr.mxu0 0.0
    %989 = vmatpush1.msra.mxu0 %v979
    %990 = vmatprep.subr.mxu0 0.0
    %991 = vmatpush1.msra.mxu0 %v978
    %992 = vmatprep.subr.mxu0 0.0
    %993 = vmatpush1.msra.mxu0 %v977
    %994 = vmatprep.subr.mxu0 0.0
    %995 = vmatpush1.msra.mxu0 %v976
    %996 = vmatprep.subr.mxu0 0.0
    %997 = vmatpush1.msra.mxu0 %v975
    %998 = vmatprep.subr.mxu0 0.0
    %999 = vmatpush1.msra.mxu0 %v974
    %1000 = vmatprep.subr.mxu0 0.0
    %1001 = vmatpush1.msra.mxu0 %v973
    %1002 = vmatprep.subr.mxu0 0.0
    %1003 = vmatpush1.msra.mxu0 %v972
    %1004 = vmatprep.subr.mxu0 0.0
    %1005 = vmatpush1.msra.mxu0 %v971
    %1006 = vmatprep.subr.mxu0 0.0
    %1007 = vmatpush1.msra.mxu0 %v970
    %1008 = vmatprep.subr.mxu0 0.0
    %1009 = vmatpush1.msra.mxu0 %v969
    %1010 = vmatprep.subr.mxu0 0.0
    %1011 = vmatpush1.msra.mxu0 %v968
    %1012 = vmatprep.subr.mxu0 0.0
    %1013 = vmatpush1.msra.mxu0 %v967
    %1014 = vmatprep.subr.mxu0 0.0
    %1015 = vmatpush1.msra.mxu0 %v966
    %1016 = vmatprep.subr.mxu0 0.0
    %1017 = vmatpush1.msra.mxu0 %v965
    %1018 = vmatprep.subr.mxu0 0.0
    %1019 = vmatpush1.msra.mxu0 %v964
    %1020 = vmatprep.subr.mxu0 0.0
    %1021 = vmatpush2.msra.mxu0 0.0
    %1022 = vmatprep.subr.mxu0 0.0
    %1023 = vmatpush2.msra.mxu0 0.0
    %1024 = vmatprep.subr.mxu0 0.0
    %1025 = vmatpush2.msra.mxu0 0.0
    %1026 = vmatprep.subr.mxu0 0.0
    %1027 = vmatpush2.msra.mxu0 0.0
    %1028 = vmatprep.subr.mxu0 0.0
    %1029 = vmatpush2.msra.mxu0 0.0
    %1030 = vmatprep.subr.mxu0 0.0
    %1031 = vmatpush2.msra.mxu0 0.0
    %1032 = vmatprep.subr.mxu0 0.0
    %1033 = vmatpush2.msra.mxu0 0.0
    %1034 = vmatprep.subr.mxu0 0.0
    %1035 = vmatpush2.msra.mxu0 0.0
    %1036 = vmatprep.subr.mxu0 0.0
    %1037 = vmatpush2.msra.mxu0 0.0
    %1038 = vmatprep.subr.mxu0 0.0
    %1039 = vmatpush2.msra.mxu0 0.0
    %1040 = vmatprep.subr.mxu0 0.0
    %1041 = vmatpush2.msra.mxu0 0.0
    %1042 = vmatprep.subr.mxu0 0.0
    %1043 = vmatpush2.msra.mxu0 0.0
    %1044 = vmatprep.subr.mxu0 0.0
    %1045 = vmatpush2.msra.mxu0 0.0
    %1046 = vmatprep.subr.mxu0 0.0
    %1047 = vmatpush2.msra.mxu0 0.0
    %1048 = vmatprep.subr.mxu0 0.0
    %1049 = vmatpush2.msra.mxu0 0.0
    %1050 = vmatprep.subr.mxu0 0.0
    %1051 = vmatpush2.msra.mxu0 0.0
    %1052 = vmatprep.mubr.f32.mxu0 0.0
    %1053 = vmatmul.mubr.f32.gmra.mxu0 %v962
    %v1054 = vpop.f32.mrf.mxu0
    %v1055 = vadd.f32 %v986, %v1054
    %v1056 = vpop.f32.mrf.mxu0
    %1057 = vdwg.mxu0
    %v1058 = vmul.f32 %v1055, 0.2
    %v1059 = vmax.f32 %v1055, %v1058
    %1060 = vst [vmem:[#allocation13] sm:$0xff] %v1059
    // Predicated region
    $region62: #{tpu_custom_call.1} parent=1 // pred_check
      _
    $region63: #{tpu_custom_call.1} parent=1 // pred_check_branch
      %1062 = sbr.rel (0) target = $region65
    $region64: #{tpu_custom_call.1} parent=1 // pred_region
      %s1064 = ssub.s32 128, 128
      %1065 = vsyncadd [#allocation4], %s1064
      %s1067 = sshll.u32 [#allocation13], 4
      %s1068 = int_to_ptr.vmem [resolvable:$true] %s1067
      %1070 = dma.vmem_to_hbm [thread:$0]  %s1068, 128, %s9, [#allocation4]
    $region65: #{tpu_custom_call.1} parent=1 // pred_fallthru
      _
    // Predicated region
    $region66: #{tpu_custom_call.1} parent=1 // pred_check
      _
    $region67: #{tpu_custom_call.1} parent=1 // pred_check_branch
      %1072 = sbr.rel (0) target = $region69
    $region68: #{tpu_custom_call.1} parent=1 // pred_region
      %1073 = dma.done [#allocation4], 128
    $region69: #{tpu_custom_call.1} parent=1 // pred_fallthru
      _
    %1074 = vsyncpa [#allocation3], 1
    %1075 = vsyncpa [#allocation6], 1
    %1076 = vsyncpa [#allocation9], 1
    %1077 = vsyncpa [#allocation12], 1
    %1078 = vsyncpa [#allocation4], 1

</llo_original>
